<compile_context>
chip_gen: v7x
topology: tpu7x:2x2x1
jax: 0.10.0
libtpu: 0.0.40
codegen_flags: <defaults>
</compile_context>

<pallas_src>
import functools
import math

import jax
import jax.numpy as jnp
from jax.experimental import pallas as pl
from jax.experimental.pallas import tpu as pltpu


def _round_up(x, m):
    return ((x + m - 1) // m) * m


def _pick_tiles(n, block_m, block_n):
    """Choose (bm, bn, n_pad) with bn | bm so n_pad == round_up(n, bm)."""
    n128 = _round_up(n, 128)
    bn = max(128, min(_round_up(block_n, 128), n128))
    bm = max(bn, min(_round_up(block_m, 128), n128))
    bm = (bm // bn) * bn                       # bn | bm  ->  lcm(bm, bn) == bm
    # Shrink bm while it only buys padding (quadratic waste) or forfeits the second
    # row tile (megacore shards the 'parallel' row axis across v7x TensorCores).
    while bm > bn and (pl.cdiv(n, bm) * bm - n128 >= bn or pl.cdiv(n, bm) < 2):
        bm -= bn
    n_pad = pl.cdiv(n, bm) * bm
    return bm, bn, n_pad


def _supcon_kernel(row_feat_ref, col_feat_ref, row_ids_ref, col_ids_ref,
                   inv_cnt_ref, out_ref, m_scr, l_scr, ps_scr,
                   *, n_valid, loss_scale):
    # row_feat_ref: [TM, Dp] bf16 anchor rows (pre-scaled by sqrt(1/T); resident
    #               across the col axis).
    # col_feat_ref: [TN, Dp] bf16 contrast rows for this col step.
    # row_ids_ref : [TM, 1] int32 positive-pair ids (-1 in padding rows).
    # col_ids_ref : [1, TN] int32.
    # inv_cnt_ref : [TM, 1] f32 exact 1/|positives(row)| (1.0 in padding rows).
    # out_ref     : [TM, 1] f32 per-anchor loss (written at the last col step).
    # scratch     : [TM, 1] f32 each: running max, running sum-exp, sum(pos * logit).
    i = pl.program_id(0)
    k = pl.program_id(1)
    tm = row_feat_ref.shape[0]
    tn = col_feat_ref.shape[0]

    @pl.when(k == 0)
    def _init():
        m_scr[...] = jnp.full(m_scr.shape, -1e30, dtype=m_scr.dtype)
        l_scr[...] = jnp.zeros_like(l_scr)
        ps_scr[...] = jnp.zeros_like(ps_scr)

    # MXU: bf16 @ bf16 -> f32 accumulation; 1/temperature is already folded into the
    # features (sqrt(1/T) on each operand), so no per-step scaling or casts here.
    # Contract the D axis of both operands: no explicit transpose / relayout.
    s = jax.lax.dot_general(row_feat_ref[...], col_feat_ref[...],
                            (((1,), (1,)), ((), ())),
                            preferred_element_type=jnp.float32)          # [TM, TN]

    pos_id = row_ids_ref[...] == col_ids_ref[...]                        # [TM, TN]

    # A tile needs the full mask treatment only if it sits on the self-contrast
    # diagonal or contains padded columns; everything else takes the cheap path
    # (no iotas / compares / selects on [TM, TN] beyond the positive-id compare).
    row_lo = i * tm
    col_lo = k * tn
    on_diag = (row_lo < col_lo + tn) & (col_lo < row_lo + tm)
    has_pad_cols = col_lo + tn > n_valid
    needs_mask = on_diag | has_pad_cols

    def _update(s_den, pos):
        # s_den: logits with excluded columns held at -1e30 (f32); pos: positives mask.
        tile_max = jnp.max(s_den, axis=1, keepdims=True)
        m_new = jnp.maximum(m_scr[...], tile_max)
        alpha = jnp.exp(m_scr[...] - m_new)
        # exp(-1e30 - m_new) underflows to exactly 0 in f32: no select needed.
        l_scr[...] = alpha * l_scr[...] + jnp.sum(jnp.exp(s_den - m_new),
                                                  axis=1, keepdims=True)
        m_scr[...] = m_new
        ps_scr[...] = ps_scr[...] + jnp.sum(jnp.where(pos, s, 0.0),
                                            axis=1, keepdims=True)

    @pl.when(jnp.logical_not(needs_mask))
    def _fast():
        # All columns are valid, none is the anchor itself.
        _update(s, pos_id)

    @pl.when(needs_mask)
    def _masked():
        row_idx = row_lo + jax.lax.broadcasted_iota(jnp.int32, (tm, 1), 0)
        col_idx = col_lo + jax.lax.broadcasted_iota(jnp.int32, (1, tn), 1)
        contrast = (row_idx != col_idx) & (col_idx < n_valid)            # [TM, TN]
        _update(jnp.where(contrast, s, jnp.float32(-1e30)), pos_id & contrast)

    @pl.when(k == pl.num_programs(1) - 1)
    def _finalize():
        lse = m_scr[...] + jnp.log(l_scr[...])                           # [TM, 1]
        mean_log_prob_pos = ps_scr[...] * inv_cnt_ref[...] - lse
        loss_row = -loss_scale * mean_log_prob_pos
        row_idx = i * tm + jax.lax.broadcasted_iota(jnp.int32, (tm, 1), 0)
        # Exclude padded rows from the final mean (valid rows always have >= 1
        # positive: the other view), so no 0/0 guard is needed.
        out_ref[...] = jnp.where(row_idx < n_valid, loss_row, 0.0)
        # TODO(synk): lane-dense (1, TM) output slab + packed scratch would shave a few
        # hundred KiB of VMEM and masked stores; kept row-oriented for robustness.


def supcon_loss(zx, zy, labels=None, mask=None, temperature=0.07,
                contrast_mode='all', base_temperature=0.07,
                block_m=1024, block_n=512):
    """Pallas-backed SupConLoss.forward (contrast_mode='all')."""
    if contrast_mode != 'all':
        # TODO(synk): contrast_mode='one' (anchor = first view only) not implemented.
        raise NotImplementedError("only contrast_mode='all' is implemented")
    if labels is not None and mask is not None:
        raise ValueError('Cannot define both `labels` and `mask`')
    if mask is not None:
        # TODO(synk): arbitrary user-supplied [bsz, bsz] masks would need an NxN mask
        # stream from HBM; only the labels / SimCLR paths are fused in-kernel.
        raise NotImplementedError('explicit `mask` argument is not implemented')

    bsz, d = zx.shape
    n = 2 * bsz

    # Positive-pair id per row of the stacked [2B, D] matrix: equal id <=> positive.
    if labels is None:
        ids_b = jnp.arange(bsz, dtype=jnp.int32)          # eye(bsz): other view only
    else:
        labels = jnp.asarray(labels).reshape(-1)
        if labels.shape[0] != bsz:
            raise ValueError('Num of labels does not match num of features')
        ids_b = labels.astype(jnp.int32)
    ids = jnp.concatenate([ids_b, ids_b], axis=0)                        # [N]

    # Exact per-anchor 1/|positives| (excluding self): 1 / (2 * count_in_batch - 1).
    cnt_b = jnp.sum(ids_b[None, :] == ids_b[:, None], axis=1).astype(jnp.float32)
    inv_cnt = jnp.concatenate([1.0 / (2.0 * cnt_b - 1.0)] * 2, axis=0)   # [N]

    # Fold sqrt(1/T) into the shared bf16 operand: (a*sqrt(s)) . (b*sqrt(s)) = s*(a.b).
    sqrt_inv_t = math.sqrt(1.0 / float(temperature))
    feat = (jnp.concatenate([zx, zy], axis=0).astype(jnp.float32)
            * jnp.float32(sqrt_inv_t)).astype(jnp.bfloat16)              # [N, D]

    bm, bn, n_pad = _pick_tiles(n, block_m, block_n)
    d_pad = _round_up(d, 128)

    feat_p = jnp.pad(feat, ((0, n_pad - n), (0, d_pad - d)))
    ids_p = jnp.pad(ids, (0, n_pad - n), constant_values=-1)
    inv_p = jnp.pad(inv_cnt, (0, n_pad - n), constant_values=1.0)
    ids_row = ids_p.reshape(n_pad, 1)
    ids_col = ids_p.reshape(1, n_pad)
    inv_row = inv_p.reshape(n_pad, 1)

    kernel = functools.partial(
        _supcon_kernel, n_valid=n,
        loss_scale=float(temperature / base_temperature))

    grid = (n_pad // bm, n_pad // bn)
    gm, gk = grid

    # Advisory cost model (bf16 features): col tiles re-streamed once per row tile.
    cost = pl.CostEstimate(
        flops=int(2 * n_pad * n_pad * d_pad),
        transcendentals=int(n_pad * n_pad + 4 * n_pad * gk),
        bytes_accessed=int(gm * n_pad * d_pad * 2       # streamed contrast tiles
                           + n_pad * d_pad * 2          # anchor row tiles
                           + (gm + 3) * n_pad * 4))     # ids / inv_cnt / per-row loss

    # Explicit scoped-VMEM budget ((bm,1) blocks pad to bm x 128 words each).
    vmem_est = (2 * bm * d_pad * 2            # anchor rows, bf16, double-buffered
                + 2 * bn * d_pad * 2          # contrast cols, bf16, double-buffered
                + (2 + 2 + 2 + 3) * bm * 128 * 4   # row ids, inv_cnt, out, 3 scratch
                + 2 * 8 * bn * 4)             # col ids
    vmem_limit = int(min(max(2 * vmem_est, 32 * 1024 * 1024), 48 * 1024 * 1024))

    per_row = pl.pallas_call(
        kernel,
        out_shape=jax.ShapeDtypeStruct((n_pad, 1), jnp.float32),
        grid=grid,
        in_specs=[
            pl.BlockSpec((bm, d_pad), lambda i, k: (i, 0)),   # anchor row tile
            # Contrast col tile; add pipeline_mode=pl.Buffered(3) if xprof shows
            # exposed DMA after tile enlargement.
            pl.BlockSpec((bn, d_pad), lambda i, k: (k, 0)),
            pl.BlockSpec((bm, 1), lambda i, k: (i, 0)),       # row ids
            pl.BlockSpec((1, bn), lambda i, k: (0, k)),       # col ids
            pl.BlockSpec((bm, 1), lambda i, k: (i, 0)),       # 1 / positive count
        ],
        out_specs=pl.BlockSpec((bm, 1), lambda i, k: (i, 0)),
        scratch_shapes=[pltpu.VMEM((bm, 1), jnp.float32) for _ in range(3)],
        compiler_params=pltpu.CompilerParams(
            dimension_semantics=("parallel", "arbitrary"),
            vmem_limit_bytes=vmem_limit),
        cost_estimate=cost,
    )(feat_p, feat_p, ids_row, ids_col, inv_row)

    # loss.view(anchor_count, batch_size).mean() == mean over the 2B real anchors.
    return jnp.sum(per_row) / n


def _supcon_ref(zx, zy, labels=None, temperature=0.07, base_temperature=0.07):
    """Pure-JAX f32 reference (mirrors the PyTorch module) for validation."""
    bsz = zx.shape[0]
    n = 2 * bsz
    feat = jnp.concatenate([zx, zy], axis=0)
    if labels is None:
        base_mask = jnp.eye(bsz, dtype=jnp.float32)
    else:
        lab = jnp.asarray(labels).reshape(-1, 1)
        base_mask = (lab == lab.T).astype(jnp.float32)
    mask = jnp.tile(base_mask, (2, 2))
    logits = feat @ feat.T / temperature
    logits = logits - jnp.max(logits, axis=1, keepdims=True)
    logits_mask = 1.0 - jnp.eye(n, dtype=jnp.float32)
    mask = mask * logits_mask
    exp_logits = jnp.exp(logits) * logits_mask
    log_prob = logits - jnp.log(jnp.sum(exp_logits, axis=1, keepdims=True))
    mlpp = jnp.sum(mask * log_prob, axis=1) / jnp.sum(mask, axis=1)
    return jnp.mean(-(temperature / base_temperature) * mlpp)


if __name__ == "__main__":
    key = jax.random.PRNGKey(0)
    B, D = 8, 32
    kx, ky, kl = jax.random.split(key, 3)
    zx = jax.random.normal(kx, (B, D), dtype=jnp.float32)
    zy = jax.random.normal(ky, (B, D), dtype=jnp.float32)
    zx = zx / jnp.linalg.norm(zx, axis=-1, keepdims=True)
    zy = zy / jnp.linalg.norm(zy, axis=-1, keepdims=True)

    # SimCLR-degenerate case (labels=None, mask=None), single tile.
    loss = supcon_loss(zx, zy)
    jax.block_until_ready(loss)
    ref = _supcon_ref(zx, zy)
    assert bool(jnp.allclose(loss, ref, rtol=5e-2, atol=5e-2)), (loss, ref)

    # Supervised (labels) path, single tile.
    labels = jax.random.randint(kl, (B,), 0, 3)
    loss_sup = supcon_loss(zx, zy, labels=labels)
    jax.block_until_ready(loss_sup)
    ref_sup = _supcon_ref(zx, zy, labels=labels)
    assert bool(jnp.allclose(loss_sup, ref_sup, rtol=5e-2, atol=5e-2)), (loss_sup, ref_sup)

    # Multi-tile case (2x2 grid with small forced tiles): exercises the fast
    # (maskless) tile path, the padded boundary tiles, and the diagonal tiles.
    B2, D2 = 80, 32
    k2x, k2y, k2l = jax.random.split(jax.random.PRNGKey(1), 3)
    zx2 = jax.random.normal(k2x, (B2, D2), dtype=jnp.float32)
    zy2 = jax.random.normal(k2y, (B2, D2), dtype=jnp.float32)
    zx2 = zx2 / jnp.linalg.norm(zx2, axis=-1, keepdims=True)
    zy2 = zy2 / jnp.linalg.norm(zy2, axis=-1, keepdims=True)

    loss2 = supcon_loss(zx2, zy2, block_m=128, block_n=128)
    jax.block_until_ready(loss2)
    ref2 = _supcon_ref(zx2, zy2)
    assert bool(jnp.allclose(loss2, ref2, rtol=5e-2, atol=5e-2)), (loss2, ref2)

    labels2 = jax.random.randint(k2l, (B2,), 0, 5)
    loss2s = supcon_loss(zx2, zy2, labels=labels2, block_m=128, block_n=128)
    jax.block_until_ready(loss2s)
    ref2s = _supcon_ref(zx2, zy2, labels=labels2)
    assert bool(jnp.allclose(loss2s, ref2s, rtol=5e-2, atol=5e-2)), (loss2s, ref2s)

    print("KERNEL_OK")
</pallas_src>

<mosaic_0001>
module attributes {stable_mosaic.version = 11 : i64} {
  func.func @_supcon_kernel(%arg0: i32, %arg1: i32, %arg2: memref<128x128xbf16, #tpu.memory_space<vmem>>, %arg3: memref<128x128xbf16, #tpu.memory_space<vmem>>, %arg4: memref<128x1xi32, #tpu.memory_space<vmem>>, %arg5: memref<1x128xi32, #tpu.memory_space<vmem>>, %arg6: memref<128x1xf32, #tpu.memory_space<vmem>>, %arg7: memref<128x1xf32, #tpu.memory_space<vmem>>, %arg8: memref<128x1xf32, #tpu.memory_space<vmem>>, %arg9: memref<128x1xf32, #tpu.memory_space<vmem>>, %arg10: memref<128x1xf32, #tpu.memory_space<vmem>>) attributes {dimension_semantics = [#tpu.dimension_semantics<parallel>, #tpu.dimension_semantics<arbitrary>], iteration_bounds = array<i64: 1, 1>, scalar_prefetch = 0 : i64, scratch_operands = 3 : i64, tpu.core_type = #tpu.core_type<tc>, window_params = [{transform_indices = @transform_0, window_bounds = array<i64: 128, 128>}, {transform_indices = @transform_1, window_bounds = array<i64: 128, 128>}, {transform_indices = @transform_2, window_bounds = array<i64: 128, 1>}, {transform_indices = @transform_3, window_bounds = array<i64: 1, 128>}, {transform_indices = @transform_4, window_bounds = array<i64: 128, 1>}, {transform_indices = @transform_5, window_bounds = array<i64: 128, 1>}]} {
    %c0_i32 = arith.constant 0 : i32
    %0 = arith.cmpi eq, %arg1, %c0_i32 : i32
    %1 = arith.extui %0 : i1 to i32
    %c0_i32_0 = arith.constant 0 : i32
    %2 = arith.cmpi ne, %1, %c0_i32_0 : i32
    scf.if %2 {
      %cst_16 = arith.constant -1.000000e+30 : f32
      %29 = vector.broadcast %cst_16 : f32 to vector<128x1xf32>
      %c0_17 = arith.constant 0 : index
      %c0_18 = arith.constant 0 : index
      %30 = vector.load %arg8[%c0_17, %c0_18] : memref<128x1xf32, #tpu.memory_space<vmem>>, vector<128x1xf32>
      tpu.vector_store %arg8[%c0_17, %c0_18], %29 {strides = array<i32>} : memref<128x1xf32, #tpu.memory_space<vmem>>, vector<128x1xf32>,
      %cst_19 = arith.constant 0.000000e+00 : f32
      %31 = vector.broadcast %cst_19 : f32 to vector<128x1xf32>
      %c0_20 = arith.constant 0 : index
      %c0_21 = arith.constant 0 : index
      %32 = vector.load %arg9[%c0_20, %c0_21] : memref<128x1xf32, #tpu.memory_space<vmem>>, vector<128x1xf32>
      tpu.vector_store %arg9[%c0_20, %c0_21], %31 {strides = array<i32>} : memref<128x1xf32, #tpu.memory_space<vmem>>, vector<128x1xf32>,
      %cst_22 = arith.constant 0.000000e+00 : f32
      %33 = vector.broadcast %cst_22 : f32 to vector<128x1xf32>
      %c0_23 = arith.constant 0 : index
      %c0_24 = arith.constant 0 : index
      %34 = vector.load %arg10[%c0_23, %c0_24] : memref<128x1xf32, #tpu.memory_space<vmem>>, vector<128x1xf32>
      tpu.vector_store %arg10[%c0_23, %c0_24], %33 {strides = array<i32>} : memref<128x1xf32, #tpu.memory_space<vmem>>, vector<128x1xf32>,
    } else {
    }
    %c0 = arith.constant 0 : index
    %c0_1 = arith.constant 0 : index
    %3 = vector.load %arg2[%c0, %c0_1] : memref<128x128xbf16, #tpu.memory_space<vmem>>, vector<128x128xbf16>
    %c0_2 = arith.constant 0 : index
    %c0_3 = arith.constant 0 : index
    %4 = vector.load %arg3[%c0_2, %c0_3] : memref<128x128xbf16, #tpu.memory_space<vmem>>, vector<128x128xbf16>
    %cst = arith.constant dense<0.000000e+00> : vector<128x128xf32>
    %5 = tpu.matmul %3, %4, %cst {dimension_numbers = #tpu.dot_dimension_numbers<[1], [1], [0], [0], [0, 0, 1, 0], [], []>} : vector<128x128xbf16>, vector<128x128xbf16>, vector<128x128xf32> -> vector<128x128xf32>
    %c0_4 = arith.constant 0 : index
    %c0_5 = arith.constant 0 : index
    %6 = vector.load %arg4[%c0_4, %c0_5] : memref<128x1xi32, #tpu.memory_space<vmem>>, vector<128x1xi32>
    %c0_6 = arith.constant 0 : index
    %c0_7 = arith.constant 0 : index
    %7 = vector.load %arg5[%c0_6, %c0_7] : memref<1x128xi32, #tpu.memory_space<vmem>>, vector<1x128xi32>
    %8 = vector.broadcast %6 : vector<128x1xi32> to vector<128x128xi32>
    %9 = vector.broadcast %7 : vector<1x128xi32> to vector<128x128xi32>
    %10 = arith.cmpi eq, %8, %9 : vector<128x128xi32>
    %c128_i32 = arith.constant 128 : i32
    %11 = arith.muli %arg0, %c128_i32 : i32
    %c128_i32_8 = arith.constant 128 : i32
    %12 = arith.muli %arg1, %c128_i32_8 : i32
    %c128_i32_9 = arith.constant 128 : i32
    %13 = arith.addi %12, %c128_i32_9 : i32
    %14 = arith.cmpi slt, %11, %13 : i32
    %c128_i32_10 = arith.constant 128 : i32
    %15 = arith.addi %11, %c128_i32_10 : i32
    %16 = arith.cmpi slt, %12, %15 : i32
    %17 = arith.andi %14, %16 : i1
    %c128_i32_11 = arith.constant 128 : i32
    %18 = arith.addi %12, %c128_i32_11 : i32
    %c16_i32 = arith.constant 16 : i32
    %19 = arith.cmpi sgt, %18, %c16_i32 : i32
    %20 = arith.ori %17, %19 : i1
    %true = arith.constant true
    %21 = arith.xori %20, %true : i1
    %22 = arith.extui %21 : i1 to i32
    %c0_i32_12 = arith.constant 0 : i32
    %23 = arith.cmpi ne, %22, %c0_i32_12 : i32
    scf.if %23 {
      %cst_16 = arith.constant dense<0xFF800000> : vector<128xf32>
      %29 = vector.multi_reduction <maximumf>, %5, %cst_16 [1] : vector<128x128xf32> to vector<128xf32>
      %30 = vector.shape_cast %29 : vector<128xf32> to vector<128x1xf32>
      %c0_17 = arith.constant 0 : index
      %c0_18 = arith.constant 0 : index
      %31 = vector.load %arg8[%c0_17, %c0_18] : memref<128x1xf32, #tpu.memory_space<vmem>>, vector<128x1xf32>
      %32 = arith.maximumf %31, %30 : vector<128x1xf32>
      %c0_19 = arith.constant 0 : index
      %c0_20 = arith.constant 0 : index
      %33 = vector.load %arg8[%c0_19, %c0_20] : memref<128x1xf32, #tpu.memory_space<vmem>>, vector<128x1xf32>
      %34 = arith.subf %33, %32 : vector<128x1xf32>
      %35 = math.exp %34 : vector<128x1xf32>
      %c0_21 = arith.constant 0 : index
      %c0_22 = arith.constant 0 : index
      %36 = vector.load %arg9[%c0_21, %c0_22] : memref<128x1xf32, #tpu.memory_space<vmem>>, vector<128x1xf32>
      %37 = arith.mulf %35, %36 : vector<128x1xf32>
      %38 = vector.broadcast %32 : vector<128x1xf32> to vector<128x128xf32>
      %39 = arith.subf %5, %38 : vector<128x128xf32>
      %40 = math.exp %39 : vector<128x128xf32>
      %cst_23 = arith.constant dense<0.000000e+00> : vector<128xf32>
      %41 = vector.multi_reduction <add>, %40, %cst_23 [1] : vector<128x128xf32> to vector<128xf32>
      %42 = vector.shape_cast %41 : vector<128xf32> to vector<128x1xf32>
      %43 = arith.addf %37, %42 : vector<128x1xf32>
      %c0_24 = arith.constant 0 : index
      %c0_25 = arith.constant 0 : index
      %44 = vector.load %arg9[%c0_24, %c0_25] : memref<128x1xf32, #tpu.memory_space<vmem>>, vector<128x1xf32>
      tpu.vector_store %arg9[%c0_24, %c0_25], %43 {strides = array<i32>} : memref<128x1xf32, #tpu.memory_space<vmem>>, vector<128x1xf32>,
      %c0_26 = arith.constant 0 : index
      %c0_27 = arith.constant 0 : index
      %45 = vector.load %arg8[%c0_26, %c0_27] : memref<128x1xf32, #tpu.memory_space<vmem>>, vector<128x1xf32>
      tpu.vector_store %arg8[%c0_26, %c0_27], %32 {strides = array<i32>} : memref<128x1xf32, #tpu.memory_space<vmem>>, vector<128x1xf32>,
      %c0_28 = arith.constant 0 : index
      %c0_29 = arith.constant 0 : index
      %46 = vector.load %arg10[%c0_28, %c0_29] : memref<128x1xf32, #tpu.memory_space<vmem>>, vector<128x1xf32>
      %cst_30 = arith.constant 0.000000e+00 : f32
      %47 = vector.broadcast %cst_30 : f32 to vector<128x128xf32>
      %48 = arith.select %10, %5, %47 : vector<128x128xi1>, vector<128x128xf32>
      %cst_31 = arith.constant dense<0.000000e+00> : vector<128xf32>
      %49 = vector.multi_reduction <add>, %48, %cst_31 [1] : vector<128x128xf32> to vector<128xf32>
      %50 = vector.shape_cast %49 : vector<128xf32> to vector<128x1xf32>
      %51 = arith.addf %46, %50 : vector<128x1xf32>
      %c0_32 = arith.constant 0 : index
      %c0_33 = arith.constant 0 : index
      %52 = vector.load %arg10[%c0_32, %c0_33] : memref<128x1xf32, #tpu.memory_space<vmem>>, vector<128x1xf32>
      tpu.vector_store %arg10[%c0_32, %c0_33], %51 {strides = array<i32>} : memref<128x1xf32, #tpu.memory_space<vmem>>, vector<128x1xf32>,
    } else {
    }
    %24 = arith.extui %20 : i1 to i32
    %c0_i32_13 = arith.constant 0 : i32
    %25 = arith.cmpi ne, %24, %c0_i32_13 : i32
    scf.if %25 {
      %29 = tpu.iota {dimensions = array<i32: 0>} : vector<128x1xi32>
      %30 = vector.broadcast %11 : i32 to vector<128x1xi32>
      %31 = arith.addi %30, %29 : vector<128x1xi32>
      %32 = tpu.iota {dimensions = array<i32: 1>} : vector<1x128xi32>
      %33 = vector.broadcast %12 : i32 to vector<1x128xi32>
      %34 = arith.addi %33, %32 : vector<1x128xi32>
      %35 = vector.broadcast %31 : vector<128x1xi32> to vector<128x128xi32>
      %36 = vector.broadcast %34 : vector<1x128xi32> to vector<128x128xi32>
      %37 = arith.cmpi ne, %35, %36 : vector<128x128xi32>
      %c16_i32_16 = arith.constant 16 : i32
      %38 = vector.broadcast %c16_i32_16 : i32 to vector<1x128xi32>
      %39 = arith.cmpi slt, %34, %38 : vector<1x128xi32>
      %40 = vector.broadcast %39 : vector<1x128xi1> to vector<128x128xi1>
      %41 = arith.andi %37, %40 : vector<128x128xi1>
      %cst_17 = arith.constant -1.000000e+30 : f32
      %42 = vector.broadcast %cst_17 : f32 to vector<128x128xf32>
      %43 = arith.select %41, %5, %42 : vector<128x128xi1>, vector<128x128xf32>
      %44 = arith.andi %10, %41 : vector<128x128xi1>
      %cst_18 = arith.constant dense<0xFF800000> : vector<128xf32>
      %45 = vector.multi_reduction <maximumf>, %43, %cst_18 [1] : vector<128x128xf32> to vector<128xf32>
      %46 = vector.shape_cast %45 : vector<128xf32> to vector<128x1xf32>
      %c0_19 = arith.constant 0 : index
      %c0_20 = arith.constant 0 : index
      %47 = vector.load %arg8[%c0_19, %c0_20] : memref<128x1xf32, #tpu.memory_space<vmem>>, vector<128x1xf32>
      %48 = arith.maximumf %47, %46 : vector<128x1xf32>
      %c0_21 = arith.constant 0 : index
      %c0_22 = arith.constant 0 : index
      %49 = vector.load %arg8[%c0_21, %c0_22] : memref<128x1xf32, #tpu.memory_space<vmem>>, vector<128x1xf32>
      %50 = arith.subf %49, %48 : vector<128x1xf32>
      %51 = math.exp %50 : vector<128x1xf32>
      %c0_23 = arith.constant 0 : index
      %c0_24 = arith.constant 0 : index
      %52 = vector.load %arg9[%c0_23, %c0_24] : memref<128x1xf32, #tpu.memory_space<vmem>>, vector<128x1xf32>
      %53 = arith.mulf %51, %52 : vector<128x1xf32>
      %54 = vector.broadcast %48 : vector<128x1xf32> to vector<128x128xf32>
      %55 = arith.subf %43, %54 : vector<128x128xf32>
      %56 = math.exp %55 : vector<128x128xf32>
      %cst_25 = arith.constant dense<0.000000e+00> : vector<128xf32>
      %57 = vector.multi_reduction <add>, %56, %cst_25 [1] : vector<128x128xf32> to vector<128xf32>
      %58 = vector.shape_cast %57 : vector<128xf32> to vector<128x1xf32>
      %59 = arith.addf %53, %58 : vector<128x1xf32>
      %c0_26 = arith.constant 0 : index
      %c0_27 = arith.constant 0 : index
      %60 = vector.load %arg9[%c0_26, %c0_27] : memref<128x1xf32, #tpu.memory_space<vmem>>, vector<128x1xf32>
      tpu.vector_store %arg9[%c0_26, %c0_27], %59 {strides = array<i32>} : memref<128x1xf32, #tpu.memory_space<vmem>>, vector<128x1xf32>,
      %c0_28 = arith.constant 0 : index
      %c0_29 = arith.constant 0 : index
      %61 = vector.load %arg8[%c0_28, %c0_29] : memref<128x1xf32, #tpu.memory_space<vmem>>, vector<128x1xf32>
      tpu.vector_store %arg8[%c0_28, %c0_29], %48 {strides = array<i32>} : memref<128x1xf32, #tpu.memory_space<vmem>>, vector<128x1xf32>,
      %c0_30 = arith.constant 0 : index
      %c0_31 = arith.constant 0 : index
      %62 = vector.load %arg10[%c0_30, %c0_31] : memref<128x1xf32, #tpu.memory_space<vmem>>, vector<128x1xf32>
      %cst_32 = arith.constant 0.000000e+00 : f32
      %63 = vector.broadcast %cst_32 : f32 to vector<128x128xf32>
      %64 = arith.select %44, %5, %63 : vector<128x128xi1>, vector<128x128xf32>
      %cst_33 = arith.constant dense<0.000000e+00> : vector<128xf32>
      %65 = vector.multi_reduction <add>, %64, %cst_33 [1] : vector<128x128xf32> to vector<128xf32>
      %66 = vector.shape_cast %65 : vector<128xf32> to vector<128x1xf32>
      %67 = arith.addf %62, %66 : vector<128x1xf32>
      %c0_34 = arith.constant 0 : index
      %c0_35 = arith.constant 0 : index
      %68 = vector.load %arg10[%c0_34, %c0_35] : memref<128x1xf32, #tpu.memory_space<vmem>>, vector<128x1xf32>
      tpu.vector_store %arg10[%c0_34, %c0_35], %67 {strides = array<i32>} : memref<128x1xf32, #tpu.memory_space<vmem>>, vector<128x1xf32>,
    } else {
    }
    %c0_i32_14 = arith.constant 0 : i32
    %26 = arith.cmpi eq, %arg1, %c0_i32_14 : i32
    %27 = arith.extui %26 : i1 to i32
    %c0_i32_15 = arith.constant 0 : i32
    %28 = arith.cmpi ne, %27, %c0_i32_15 : i32
    scf.if %28 {
      %c0_16 = arith.constant 0 : index
      %c0_17 = arith.constant 0 : index
      %29 = vector.load %arg8[%c0_16, %c0_17] : memref<128x1xf32, #tpu.memory_space<vmem>>, vector<128x1xf32>
      %c0_18 = arith.constant 0 : index
      %c0_19 = arith.constant 0 : index
      %30 = vector.load %arg9[%c0_18, %c0_19] : memref<128x1xf32, #tpu.memory_space<vmem>>, vector<128x1xf32>
      %31 = math.log %30 : vector<128x1xf32>
      %32 = arith.addf %29, %31 : vector<128x1xf32>
      %c0_20 = arith.constant 0 : index
      %c0_21 = arith.constant 0 : index
      %33 = vector.load %arg10[%c0_20, %c0_21] : memref<128x1xf32, #tpu.memory_space<vmem>>, vector<128x1xf32>
      %c0_22 = arith.constant 0 : index
      %c0_23 = arith.constant 0 : index
      %34 = vector.load %arg6[%c0_22, %c0_23] : memref<128x1xf32, #tpu.memory_space<vmem>>, vector<128x1xf32>
      %35 = arith.mulf %33, %34 : vector<128x1xf32>
      %36 = arith.subf %35, %32 : vector<128x1xf32>
      %cst_24 = arith.constant -1.000000e+00 : f32
      %37 = vector.broadcast %cst_24 : f32 to vector<128x1xf32>
      %38 = arith.mulf %37, %36 : vector<128x1xf32>
      %c128_i32_25 = arith.constant 128 : i32
      %39 = arith.muli %arg0, %c128_i32_25 : i32
      %40 = tpu.iota {dimensions = array<i32: 0>} : vector<128x1xi32>
      %41 = vector.broadcast %39 : i32 to vector<128x1xi32>
      %42 = arith.addi %41, %40 : vector<128x1xi32>
      %c16_i32_26 = arith.constant 16 : i32
      %43 = vector.broadcast %c16_i32_26 : i32 to vector<128x1xi32>
      %44 = arith.cmpi slt, %42, %43 : vector<128x1xi32>
      %cst_27 = arith.constant 0.000000e+00 : f32
      %45 = vector.broadcast %cst_27 : f32 to vector<128x1xf32>
      %46 = arith.select %44, %38, %45 : vector<128x1xi1>, vector<128x1xf32>
      %c0_28 = arith.constant 0 : index
      %c0_29 = arith.constant 0 : index
      %47 = vector.load %arg7[%c0_28, %c0_29] : memref<128x1xf32, #tpu.memory_space<vmem>>, vector<128x1xf32>
      tpu.vector_store %arg7[%c0_28, %c0_29], %46 {strides = array<i32>} : memref<128x1xf32, #tpu.memory_space<vmem>>, vector<128x1xf32>,
    } else {
    }
    return
  }
  func.func @transform_0(%arg0: i32, %arg1: i32) -> (i32, i32) {
    %c0_i32 = arith.constant 0 : i32
    %c0_i32_0 = arith.constant 0 : i32
    return %arg0, %c0_i32 : i32, i32
  }
  func.func @transform_1(%arg0: i32, %arg1: i32) -> (i32, i32) {
    %c0_i32 = arith.constant 0 : i32
    %c0_i32_0 = arith.constant 0 : i32
    return %arg1, %c0_i32 : i32, i32
  }
  func.func @transform_2(%arg0: i32, %arg1: i32) -> (i32, i32) {
    %c0_i32 = arith.constant 0 : i32
    %c0_i32_0 = arith.constant 0 : i32
    return %arg0, %c0_i32 : i32, i32
  }
  func.func @transform_3(%arg0: i32, %arg1: i32) -> (i32, i32) {
    %c0_i32 = arith.constant 0 : i32
    %c0_i32_0 = arith.constant 0 : i32
    return %c0_i32, %arg1 : i32, i32
  }
  func.func @transform_4(%arg0: i32, %arg1: i32) -> (i32, i32) {
    %c0_i32 = arith.constant 0 : i32
    %c0_i32_0 = arith.constant 0 : i32
    return %arg0, %c0_i32 : i32, i32
  }
  func.func @transform_5(%arg0: i32, %arg1: i32) -> (i32, i32) {
    %c0_i32 = arith.constant 0 : i32
    %c0_i32_0 = arith.constant 0 : i32
    return %arg0, %c0_i32 : i32, i32
  }
}

</mosaic_0001>

<llo_original>
// kernel: tpu_custom_call.1
$region0: #{tpu_custom_call.1}
  #allocation0 [shape = 'u32[]', space=smem, size = 0x4, offset = 0x4, fixed_abs, tag = 'smem constant byte address 0x4 - core index']
  #allocation1 [shape = 'u32[144,128]{1,0:T(1,128)}', space=vmem, size = 0x12000, scoped, tag = 'internal scratch']
  #allocation2 [shape = 'f32[128,1]{1,0:T(8,128)}', space=vmem, size = 0x10000, scoped, tag = 'scratch operand']
  #allocation3 [shape = 'f32[128,1]{1,0:T(8,128)}', space=vmem, size = 0x10000, scoped, tag = 'scratch operand']
  #allocation4 [shape = 'f32[128,1]{1,0:T(8,128)}', space=vmem, size = 0x10000, scoped, tag = 'scratch operand']
  %s0 = inlined_call_operand.vmem [shape: bf16[128,128], index: 0, kind: input, shape index: {}]
  %s1 = inlined_call_operand.vmem [shape: bf16[128,128], index: 1, kind: input, shape index: {}]
  %s2 = inlined_call_operand.vmem [shape: s32[128,1], index: 2, kind: input, shape index: {}]
  %s3 = inlined_call_operand.vmem [shape: s32[1,128], index: 3, kind: input, shape index: {}]
  %s4 = inlined_call_operand.vmem [shape: f32[128,1], index: 4, kind: input, shape index: {}]
  %s5 = inlined_call_operand.vmem [shape: f32[128,1], index: 5, kind: output, shape index: {}]
  %s6 = sld [smem:[#allocation0]]
  $region46: #{tpu_custom_call.1} parent=0
    _
  %s8 = ssub.s32 1, %s6
  %s9 = scalar_select 0, %s8, %s6
  // Predicated region
  $region2: #{tpu_custom_call.1} parent=0 // pred_check
    _
  $region3: #{tpu_custom_call.1} parent=0 // pred_check_branch
    %11 = sbr.rel (0) target = $region5
  $region4: #{tpu_custom_call.1} parent=0 // pred_region
    _
  $region5: #{tpu_custom_call.1} parent=0 // pred_fallthru
    _
  // Predicated region
  $region6: #{tpu_custom_call.1} parent=0 // pred_check
    _
  $region7: #{tpu_custom_call.1} parent=0 // pred_check_branch
    %13 = sbr.rel (0) target = $region9
  $region8: #{tpu_custom_call.1} parent=0 // pred_region
    _
  $region9: #{tpu_custom_call.1} parent=0 // pred_fallthru
    _
  // Predicated region
  $region10: #{tpu_custom_call.1} parent=0 // pred_check
    _
  $region11: #{tpu_custom_call.1} parent=0 // pred_check_branch
    %15 = sbr.rel (0) target = $region13
  $region12: #{tpu_custom_call.1} parent=0 // pred_region
    _
  $region13: #{tpu_custom_call.1} parent=0 // pred_fallthru
    _
  // Predicated region
  $region14: #{tpu_custom_call.1} parent=0 // pred_check
    _
  $region15: #{tpu_custom_call.1} parent=0 // pred_check_branch
    %17 = sbr.rel (0) target = $region17
  $region16: #{tpu_custom_call.1} parent=0 // pred_region
    _
  $region17: #{tpu_custom_call.1} parent=0 // pred_fallthru
    _
  // Predicated region
  $region18: #{tpu_custom_call.1} parent=0 // pred_check
    _
  $region19: #{tpu_custom_call.1} parent=0 // pred_check_branch
    %19 = sbr.rel (0) target = $region21
  $region20: #{tpu_custom_call.1} parent=0 // pred_region
    _
  $region21: #{tpu_custom_call.1} parent=0 // pred_fallthru
    _
  %p21 = scmp.eq.s32.totalorder 0, 0
  // Predicated region
  $region22: #{tpu_custom_call.1} parent=0 // pred_check
    %p22 = pneg %p21
  $region23: #{tpu_custom_call.1} parent=0 // pred_check_branch
    %24 = sbr.rel (%p22) target = $region25
  $region24: #{tpu_custom_call.1} parent=0 // pred_region
    %vm25 = vcmask 7168
    %26 = vst.msk [vmem:[#allocation2] sm:$0xff] %vm25, -1e+30
    %27 = vst.msk [vmem:[#allocation2 + $0x8] sm:$0xff] %vm25, -1e+30
    %28 = vst.msk [vmem:[#allocation2 + $0x10] sm:$0xff] %vm25, -1e+30
    %29 = vst.msk [vmem:[#allocation2 + $0x18] sm:$0xff] %vm25, -1e+30
    %30 = vst.msk [vmem:[#allocation2 + $0x20] sm:$0xff] %vm25, -1e+30
    %31 = vst.msk [vmem:[#allocation2 + $0x28] sm:$0xff] %vm25, -1e+30
    %32 = vst.msk [vmem:[#allocation2 + $0x30] sm:$0xff] %vm25, -1e+30
    %33 = vst.msk [vmem:[#allocation2 + $0x38] sm:$0xff] %vm25, -1e+30
    %34 = vst.msk [vmem:[#allocation2 + $0x40] sm:$0xff] %vm25, -1e+30
    %35 = vst.msk [vmem:[#allocation2 + $0x48] sm:$0xff] %vm25, -1e+30
    %36 = vst.msk [vmem:[#allocation2 + $0x50] sm:$0xff] %vm25, -1e+30
    %37 = vst.msk [vmem:[#allocation2 + $0x58] sm:$0xff] %vm25, -1e+30
    %38 = vst.msk [vmem:[#allocation2 + $0x60] sm:$0xff] %vm25, -1e+30
    %39 = vst.msk [vmem:[#allocation2 + $0x68] sm:$0xff] %vm25, -1e+30
    %40 = vst.msk [vmem:[#allocation2 + $0x70] sm:$0xff] %vm25, -1e+30
    %41 = vst.msk [vmem:[#allocation2 + $0x78] sm:$0xff] %vm25, -1e+30
    %42 = vst.msk [vmem:[#allocation3] sm:$0xff] %vm25, 0.0
    %43 = vst.msk [vmem:[#allocation3 + $0x8] sm:$0xff] %vm25, 0.0
    %44 = vst.msk [vmem:[#allocation3 + $0x10] sm:$0xff] %vm25, 0.0
    %45 = vst.msk [vmem:[#allocation3 + $0x18] sm:$0xff] %vm25, 0.0
    %46 = vst.msk [vmem:[#allocation3 + $0x20] sm:$0xff] %vm25, 0.0
    %47 = vst.msk [vmem:[#allocation3 + $0x28] sm:$0xff] %vm25, 0.0
    %48 = vst.msk [vmem:[#allocation3 + $0x30] sm:$0xff] %vm25, 0.0
    %49 = vst.msk [vmem:[#allocation3 + $0x38] sm:$0xff] %vm25, 0.0
    %50 = vst.msk [vmem:[#allocation3 + $0x40] sm:$0xff] %vm25, 0.0
    %51 = vst.msk [vmem:[#allocation3 + $0x48] sm:$0xff] %vm25, 0.0
    %52 = vst.msk [vmem:[#allocation3 + $0x50] sm:$0xff] %vm25, 0.0
    %53 = vst.msk [vmem:[#allocation3 + $0x58] sm:$0xff] %vm25, 0.0
    %54 = vst.msk [vmem:[#allocation3 + $0x60] sm:$0xff] %vm25, 0.0
    %55 = vst.msk [vmem:[#allocation3 + $0x68] sm:$0xff] %vm25, 0.0
    %56 = vst.msk [vmem:[#allocation3 + $0x70] sm:$0xff] %vm25, 0.0
    %57 = vst.msk [vmem:[#allocation3 + $0x78] sm:$0xff] %vm25, 0.0
    %58 = vst.msk [vmem:[#allocation4] sm:$0xff] %vm25, 0.0
    %59 = vst.msk [vmem:[#allocation4 + $0x8] sm:$0xff] %vm25, 0.0
    %60 = vst.msk [vmem:[#allocation4 + $0x10] sm:$0xff] %vm25, 0.0
    %61 = vst.msk [vmem:[#allocation4 + $0x18] sm:$0xff] %vm25, 0.0
    %62 = vst.msk [vmem:[#allocation4 + $0x20] sm:$0xff] %vm25, 0.0
    %63 = vst.msk [vmem:[#allocation4 + $0x28] sm:$0xff] %vm25, 0.0
    %64 = vst.msk [vmem:[#allocation4 + $0x30] sm:$0xff] %vm25, 0.0
    %65 = vst.msk [vmem:[#allocation4 + $0x38] sm:$0xff] %vm25, 0.0
    %66 = vst.msk [vmem:[#allocation4 + $0x40] sm:$0xff] %vm25, 0.0
    %67 = vst.msk [vmem:[#allocation4 + $0x48] sm:$0xff] %vm25, 0.0
    %68 = vst.msk [vmem:[#allocation4 + $0x50] sm:$0xff] %vm25, 0.0
    %69 = vst.msk [vmem:[#allocation4 + $0x58] sm:$0xff] %vm25, 0.0
    %70 = vst.msk [vmem:[#allocation4 + $0x60] sm:$0xff] %vm25, 0.0
    %71 = vst.msk [vmem:[#allocation4 + $0x68] sm:$0xff] %vm25, 0.0
    %72 = vst.msk [vmem:[#allocation4 + $0x70] sm:$0xff] %vm25, 0.0
    %73 = vst.msk [vmem:[#allocation4 + $0x78] sm:$0xff] %vm25, 0.0
  $region25: #{tpu_custom_call.1} parent=0 // pred_fallthru
    _
  %v74 = vld [vmem:[%s0] sm:$0xf]
  %v75 = vld [vmem:[%s0 + $0x4] sm:$0xf]
  %v76 = vld [vmem:[%s0 + $0x8] sm:$0xf]
  %v77 = vld [vmem:[%s0 + $0xc] sm:$0xf]
  %v78 = vld [vmem:[%s0 + $0x10] sm:$0xf]
  %v79 = vld [vmem:[%s0 + $0x14] sm:$0xf]
  %v80 = vld [vmem:[%s0 + $0x18] sm:$0xf]
  %v81 = vld [vmem:[%s0 + $0x1c] sm:$0xf]
  %v82 = vld [vmem:[%s0 + $0x20] sm:$0xf]
  %v83 = vld [vmem:[%s0 + $0x24] sm:$0xf]
  %v84 = vld [vmem:[%s0 + $0x28] sm:$0xf]
  %v85 = vld [vmem:[%s0 + $0x2c] sm:$0xf]
  %v86 = vld [vmem:[%s0 + $0x30] sm:$0xf]
  %v87 = vld [vmem:[%s0 + $0x34] sm:$0xf]
  %v88 = vld [vmem:[%s0 + $0x38] sm:$0xf]
  %v89 = vld [vmem:[%s0 + $0x3c] sm:$0xf]
  %v90 = vld [vmem:[%s1] sm:$0xf]
  %v91 = vld [vmem:[%s1 + $0x4] sm:$0xf]
  %v92 = vld [vmem:[%s1 + $0x8] sm:$0xf]
  %v93 = vld [vmem:[%s1 + $0xc] sm:$0xf]
  %v94 = vld [vmem:[%s1 + $0x10] sm:$0xf]
  %v95 = vld [vmem:[%s1 + $0x14] sm:$0xf]
  %v96 = vld [vmem:[%s1 + $0x18] sm:$0xf]
  %v97 = vld [vmem:[%s1 + $0x1c] sm:$0xf]
  %v98 = vld [vmem:[%s1 + $0x20] sm:$0xf]
  %v99 = vld [vmem:[%s1 + $0x24] sm:$0xf]
  %v100 = vld [vmem:[%s1 + $0x28] sm:$0xf]
  %v101 = vld [vmem:[%s1 + $0x2c] sm:$0xf]
  %v102 = vld [vmem:[%s1 + $0x30] sm:$0xf]
  %v103 = vld [vmem:[%s1 + $0x34] sm:$0xf]
  %v104 = vld [vmem:[%s1 + $0x38] sm:$0xf]
  %v105 = vld [vmem:[%s1 + $0x3c] sm:$0xf]
  %v122 = vunpack.c.l.b16 %v74
  %v123 = vunpack.c.l.b16 %v75
  %v124 = vunpack.c.l.b16 %v76
  %v125 = vunpack.c.l.b16 %v77
  %v126 = vunpack.c.l.b16 %v78
  %v127 = vunpack.c.l.b16 %v79
  %v128 = vunpack.c.l.b16 %v80
  %v129 = vunpack.c.l.b16 %v81
  %v130 = vunpack.c.l.b16 %v82
  %v131 = vunpack.c.l.b16 %v83
  %v132 = vunpack.c.l.b16 %v84
  %v133 = vunpack.c.l.b16 %v85
  %v134 = vunpack.c.l.b16 %v86
  %v135 = vunpack.c.l.b16 %v87
  %v136 = vunpack.c.l.b16 %v88
  %v137 = vunpack.c.l.b16 %v89
  %v138 = vpack.c.b16 %v123, %v122
  %v139 = vpack.c.b16 %v125, %v124
  %v140 = vpack.c.b16 %v127, %v126
  %v141 = vpack.c.b16 %v129, %v128
  %v142 = vpack.c.b16 %v131, %v130
  %v143 = vpack.c.b16 %v133, %v132
  %v144 = vpack.c.b16 %v135, %v134
  %v145 = vpack.c.b16 %v137, %v136
  %v170 = vunpack.c.l.b16 %v90
  %v171 = vunpack.c.l.b16 %v91
  %v172 = vunpack.c.l.b16 %v92
  %v173 = vunpack.c.l.b16 %v93
  %v174 = vunpack.c.l.b16 %v94
  %v175 = vunpack.c.l.b16 %v95
  %v176 = vunpack.c.l.b16 %v96
  %v177 = vunpack.c.l.b16 %v97
  %v178 = vunpack.c.l.b16 %v98
  %v179 = vunpack.c.l.b16 %v99
  %v180 = vunpack.c.l.b16 %v100
  %v181 = vunpack.c.l.b16 %v101
  %v182 = vunpack.c.l.b16 %v102
  %v183 = vunpack.c.l.b16 %v103
  %v184 = vunpack.c.l.b16 %v104
  %v185 = vunpack.c.l.b16 %v105
  %v186 = vpack.c.b16 %v171, %v170
  %v187 = vpack.c.b16 %v173, %v172
  %v188 = vpack.c.b16 %v175, %v174
  %v189 = vpack.c.b16 %v177, %v176
  %v190 = vpack.c.b16 %v179, %v178
  %v191 = vpack.c.b16 %v181, %v180
  %v192 = vpack.c.b16 %v183, %v182
  %v193 = vpack.c.b16 %v185, %v184
  %202 = vmatprep.subr.bf16.mxu0 0
  %203 = vmatpush1.bf16.xpose.msra.mxu0 %v186
  %204 = vmatprep.subr.bf16.mxu0 0
  %205 = vmatpush1.bf16.xpose.msra.mxu0 %v187
  %206 = vmatprep.subr.bf16.mxu0 0
  %207 = vmatpush1.bf16.xpose.msra.mxu0 %v188
  %208 = vmatprep.subr.bf16.mxu0 0
  %209 = vmatpush1.bf16.xpose.msra.mxu0 %v189
  %210 = vmatprep.subr.bf16.mxu0 0
  %211 = vmatpush1.bf16.xpose.msra.mxu0 %v190
  %212 = vmatprep.subr.bf16.mxu0 0
  %213 = vmatpush1.bf16.xpose.msra.mxu0 %v191
  %214 = vmatprep.subr.bf16.mxu0 0
  %215 = vmatpush1.bf16.xpose.msra.mxu0 %v192
  %216 = vmatprep.subr.bf16.mxu0 0
  %217 = vmatpush1.bf16.xpose.msra.mxu0 %v193
  %218 = vmatprep.subr.bf16.mxu0 0
  %219 = vmatpush1.bf16.xpose.msra.mxu0 0
  %220 = vmatprep.subr.bf16.mxu0 0
  %221 = vmatpush1.bf16.xpose.msra.mxu0 0
  %222 = vmatprep.subr.bf16.mxu0 0
  %223 = vmatpush1.bf16.xpose.msra.mxu0 0
  %224 = vmatprep.subr.bf16.mxu0 0
  %225 = vmatpush1.bf16.xpose.msra.mxu0 0
  %226 = vmatprep.subr.bf16.mxu0 0
  %227 = vmatpush1.bf16.xpose.msra.mxu0 0
  %228 = vmatprep.subr.bf16.mxu0 0
  %229 = vmatpush1.bf16.xpose.msra.mxu0 0
  %230 = vmatprep.subr.bf16.mxu0 0
  %231 = vmatpush1.bf16.xpose.msra.mxu0 0
  %232 = vmatprep.subr.bf16.mxu0 0
  %233 = vmatpush1.bf16.xpose.msra.mxu0 0
  %234 = vmatprep.mubr.bf16.mxu0 0
  %235 = vmatmul.mubr.bf16.gmra.mrb[0].mxu0 %v138
  %v236 = vpop.f32.mrb[0].mxu0
  %v237 = vadd.f32 0.0, %v236
  %v238 = vpop.f32.mrb[0].mxu0
  %v239 = vpop.f32.mrb[0].mxu0
  %v240 = vadd.f32 0.0, %v239
  %v241 = vpop.f32.mrb[0].mxu0
  %242 = vmatprep.mubr.bf16.mxu0 0
  %243 = vmatmul.mubr.bf16.gmra.mrb[0].mxu0 %v139
  %v244 = vpop.f32.mrb[0].mxu0
  %v245 = vadd.f32 0.0, %v244
  %v246 = vpop.f32.mrb[0].mxu0
  %v247 = vpop.f32.mrb[0].mxu0
  %v248 = vadd.f32 0.0, %v247
  %v249 = vpop.f32.mrb[0].mxu0
  %250 = vmatprep.mubr.bf16.mxu0 0
  %251 = vmatmul.mubr.bf16.gmra.mrb[0].mxu0 %v140
  %v252 = vpop.f32.mrb[0].mxu0
  %v253 = vadd.f32 0.0, %v252
  %v254 = vpop.f32.mrb[0].mxu0
  %v255 = vpop.f32.mrb[0].mxu0
  %v256 = vadd.f32 0.0, %v255
  %v257 = vpop.f32.mrb[0].mxu0
  %258 = vmatprep.mubr.bf16.mxu0 0
  %259 = vmatmul.mubr.bf16.gmra.mrb[0].mxu0 %v141
  %v260 = vpop.f32.mrb[0].mxu0
  %v261 = vadd.f32 0.0, %v260
  %v262 = vpop.f32.mrb[0].mxu0
  %v263 = vpop.f32.mrb[0].mxu0
  %v264 = vadd.f32 0.0, %v263
  %v265 = vpop.f32.mrb[0].mxu0
  %266 = vmatprep.mubr.bf16.mxu0 0
  %267 = vmatmul.mubr.bf16.gmra.mrb[0].mxu0 %v142
  %v268 = vpop.f32.mrb[0].mxu0
  %v269 = vadd.f32 0.0, %v268
  %v270 = vpop.f32.mrb[0].mxu0
  %v271 = vpop.f32.mrb[0].mxu0
  %v272 = vadd.f32 0.0, %v271
  %v273 = vpop.f32.mrb[0].mxu0
  %274 = vmatprep.mubr.bf16.mxu0 0
  %275 = vmatmul.mubr.bf16.gmra.mrb[0].mxu0 %v143
  %v276 = vpop.f32.mrb[0].mxu0
  %v277 = vadd.f32 0.0, %v276
  %v278 = vpop.f32.mrb[0].mxu0
  %v279 = vpop.f32.mrb[0].mxu0
  %v280 = vadd.f32 0.0, %v279
  %v281 = vpop.f32.mrb[0].mxu0
  %282 = vmatprep.mubr.bf16.mxu0 0
  %283 = vmatmul.mubr.bf16.gmra.mrb[0].mxu0 %v144
  %v284 = vpop.f32.mrb[0].mxu0
  %v285 = vadd.f32 0.0, %v284
  %v286 = vpop.f32.mrb[0].mxu0
  %v287 = vpop.f32.mrb[0].mxu0
  %v288 = vadd.f32 0.0, %v287
  %v289 = vpop.f32.mrb[0].mxu0
  %290 = vmatprep.mubr.bf16.mxu0 0
  %291 = vmatmul.mubr.bf16.gmra.mrb[0].mxu0 %v145
  %v292 = vpop.f32.mrb[0].mxu0
  %v293 = vadd.f32 0.0, %v292
  %v294 = vpop.f32.mrb[0].mxu0
  %v295 = vpop.f32.mrb[0].mxu0
  %v296 = vadd.f32 0.0, %v295
  %v297 = vpop.f32.mrb[0].mxu0
  %298 = vdwg.mxu0
  %v299 = vld [vmem:[%s2] sm:$0xff]
  %v300 = vld [vmem:[%s2 + $0x8] sm:$0xff]
  %v301 = vld [vmem:[%s2 + $0x10] sm:$0xff]
  %v302 = vld [vmem:[%s2 + $0x18] sm:$0xff]
  %v303 = vld [vmem:[%s2 + $0x20] sm:$0xff]
  %v304 = vld [vmem:[%s2 + $0x28] sm:$0xff]
  %v305 = vld [vmem:[%s2 + $0x30] sm:$0xff]
  %v306 = vld [vmem:[%s2 + $0x38] sm:$0xff]
  %v307 = vld [vmem:[%s2 + $0x40] sm:$0xff]
  %v308 = vld [vmem:[%s2 + $0x48] sm:$0xff]
  %v309 = vld [vmem:[%s2 + $0x50] sm:$0xff]
  %v310 = vld [vmem:[%s2 + $0x58] sm:$0xff]
  %v311 = vld [vmem:[%s2 + $0x60] sm:$0xff]
  %v312 = vld [vmem:[%s2 + $0x68] sm:$0xff]
  %v313 = vld [vmem:[%s2 + $0x70] sm:$0xff]
  %v314 = vld [vmem:[%s2 + $0x78] sm:$0xff]
  %v315 = vld [vmem:[%s3] sm:$0x1]
  %316 = vset.pattern.permute.xlu0 0
  %317 = vperm.xlu0 %316, %v299
  %v318 = vpop.permute.xlu0 %317
  %319 = vset.pattern.permute.xlu0 0
  %320 = vperm.xlu0 %319, %v300
  %v321 = vpop.permute.xlu0 %320
  %322 = vset.pattern.permute.xlu0 0
  %323 = vperm.xlu0 %322, %v301
  %v324 = vpop.permute.xlu0 %323
  %325 = vset.pattern.permute.xlu0 0
  %326 = vperm.xlu0 %325, %v302
  %v327 = vpop.permute.xlu0 %326
  %328 = vset.pattern.permute.xlu0 0
  %329 = vperm.xlu0 %328, %v303
  %v330 = vpop.permute.xlu0 %329
  %331 = vset.pattern.permute.xlu0 0
  %332 = vperm.xlu0 %331, %v304
  %v333 = vpop.permute.xlu0 %332
  %334 = vset.pattern.permute.xlu0 0
  %335 = vperm.xlu0 %334, %v305
  %v336 = vpop.permute.xlu0 %335
  %337 = vset.pattern.permute.xlu0 0
  %338 = vperm.xlu0 %337, %v306
  %v339 = vpop.permute.xlu0 %338
  %340 = vset.pattern.permute.xlu0 0
  %341 = vperm.xlu0 %340, %v307
  %v342 = vpop.permute.xlu0 %341
  %343 = vset.pattern.permute.xlu0 0
  %344 = vperm.xlu0 %343, %v308
  %v345 = vpop.permute.xlu0 %344
  %346 = vset.pattern.permute.xlu0 0
  %347 = vperm.xlu0 %346, %v309
  %v348 = vpop.permute.xlu0 %347
  %349 = vset.pattern.permute.xlu0 0
  %350 = vperm.xlu0 %349, %v310
  %v351 = vpop.permute.xlu0 %350
  %352 = vset.pattern.permute.xlu0 0
  %353 = vperm.xlu0 %352, %v311
  %v354 = vpop.permute.xlu0 %353
  %355 = vset.pattern.permute.xlu0 0
  %356 = vperm.xlu0 %355, %v312
  %v357 = vpop.permute.xlu0 %356
  %358 = vset.pattern.permute.xlu0 0
  %359 = vperm.xlu0 %358, %v313
  %v360 = vpop.permute.xlu0 %359
  %361 = vset.pattern.permute.xlu0 0
  %362 = vperm.xlu0 %361, %v314
  %v363 = vpop.permute.xlu0 %362
  %v364 = vlaneseq
  %v365 = vshrl.u32 %v364, 7
  %v366 = vsub.s32 0, %v365
  %v367 = vrot.slane %v315, %v366
  %vm368 = vcmp.eq.s32.totalorder %v318, %v367
  %vm369 = vcmp.eq.s32.totalorder %v321, %v367
  %vm370 = vcmp.eq.s32.totalorder %v324, %v367
  %vm371 = vcmp.eq.s32.totalorder %v327, %v367
  %vm372 = vcmp.eq.s32.totalorder %v330, %v367
  %vm373 = vcmp.eq.s32.totalorder %v333, %v367
  %vm374 = vcmp.eq.s32.totalorder %v336, %v367
  %vm375 = vcmp.eq.s32.totalorder %v339, %v367
  %vm376 = vcmp.eq.s32.totalorder %v342, %v367
  %vm377 = vcmp.eq.s32.totalorder %v345, %v367
  %vm378 = vcmp.eq.s32.totalorder %v348, %v367
  %vm379 = vcmp.eq.s32.totalorder %v351, %v367
  %vm380 = vcmp.eq.s32.totalorder %v354, %v367
  %vm381 = vcmp.eq.s32.totalorder %v357, %v367
  %vm382 = vcmp.eq.s32.totalorder %v360, %v367
  %vm383 = vcmp.eq.s32.totalorder %v363, %v367
  %s384 = smul.u32 0, 128
  %s385 = smul.u32 0, 128
  %s386 = sadd.s32 %s385, 128
  %p387 = scmp.lt.s32.totalorder %s384, %s386
  %s388 = sadd.s32 %s384, 128
  %p389 = scmp.lt.s32.totalorder %s385, %s388
  %p390 = pnand %p387, %p389
  %p391 = pneg %p390
  %p392 = scmp.gt.s32.totalorder %s386, 16
  %p393 = por %p391, %p392
  // Predicated region
  $region26: #{tpu_custom_call.1} parent=0 // pred_check
    %p394 = pneg %p393
  $region27: #{tpu_custom_call.1} parent=0 // pred_check_branch
    %396 = sbr.rel (%p394) target = $region29
  $region28: #{tpu_custom_call.1} parent=0 // pred_region
    %v397 = vlaneseq
    %v398 = vshrl.u32 %v397, 7
    %v399 = vadd.s32 %v398, 8
    %v400 = vadd.s32 %v398, 16
    %v401 = vadd.s32 %v398, 24
    %v402 = vadd.s32 %v398, 32
    %v403 = vadd.s32 %v398, 40
    %v404 = vadd.s32 %v398, 48
    %v405 = vadd.s32 %v398, 56
    %v406 = vadd.s32 %v398, 64
    %v407 = vadd.s32 %v398, 72
    %v408 = vadd.s32 %v398, 80
    %v409 = vadd.s32 %v398, 88
    %v410 = vadd.s32 %v398, 96
    %v411 = vadd.s32 %v398, 104
    %v412 = vadd.s32 %v398, 112
    %v413 = vadd.s32 %v398, 120
    %v414 = vstv %s384
    %v415 = vadd.s32 %v414, %v398
    %v416 = vadd.s32 %v414, %v399
    %v417 = vadd.s32 %v414, %v400
    %v418 = vadd.s32 %v414, %v401
    %v419 = vadd.s32 %v414, %v402
    %v420 = vadd.s32 %v414, %v403
    %v421 = vadd.s32 %v414, %v404
    %v422 = vadd.s32 %v414, %v405
    %v423 = vadd.s32 %v414, %v406
    %v424 = vadd.s32 %v414, %v407
    %v425 = vadd.s32 %v414, %v408
    %v426 = vadd.s32 %v414, %v409
    %v427 = vadd.s32 %v414, %v410
    %v428 = vadd.s32 %v414, %v411
    %v429 = vadd.s32 %v414, %v412
    %v430 = vadd.s32 %v414, %v413
    %v431 = vlaneseq
    %v432 = vand.u32 %v431, 127
    %v433 = vstv %s385
    %v434 = vadd.s32 %v433, %v432
    %vm435 = vcmp.ne.s32.totalorder %v415, %v434
    %vm436 = vcmp.ne.s32.totalorder %v416, %v434
    %vm437 = vcmp.ne.s32.totalorder %v417, %v434
    %vm438 = vcmp.ne.s32.totalorder %v418, %v434
    %vm439 = vcmp.ne.s32.totalorder %v419, %v434
    %vm440 = vcmp.ne.s32.totalorder %v420, %v434
    %vm441 = vcmp.ne.s32.totalorder %v421, %v434
    %vm442 = vcmp.ne.s32.totalorder %v422, %v434
    %vm443 = vcmp.ne.s32.totalorder %v423, %v434
    %vm444 = vcmp.ne.s32.totalorder %v424, %v434
    %vm445 = vcmp.ne.s32.totalorder %v425, %v434
    %vm446 = vcmp.ne.s32.totalorder %v426, %v434
    %vm447 = vcmp.ne.s32.totalorder %v427, %v434
    %vm448 = vcmp.ne.s32.totalorder %v428, %v434
    %vm449 = vcmp.ne.s32.totalorder %v429, %v434
    %vm450 = vcmp.ne.s32.totalorder %v430, %v434
    %vm451 = vcmp.lt.s32.totalorder %v434, 16
    %v452 = vsel %vm451, 1, 0
    %vm453 = vcmp.eq.s32.totalorder %v452, 1
    %vm454 = vmand %vm435, %vm453
    %vm455 = vmand %vm436, %vm453
    %vm456 = vmand %vm437, %vm453
    %vm457 = vmand %vm438, %vm453
    %vm458 = vmand %vm439, %vm453
    %vm459 = vmand %vm440, %vm453
    %vm460 = vmand %vm441, %vm453
    %vm461 = vmand %vm442, %vm453
    %vm462 = vmand %vm443, %vm453
    %vm463 = vmand %vm444, %vm453
    %vm464 = vmand %vm445, %vm453
    %vm465 = vmand %vm446, %vm453
    %vm466 = vmand %vm447, %vm453
    %vm467 = vmand %vm448, %vm453
    %vm468 = vmand %vm449, %vm453
    %vm469 = vmand %vm450, %vm453
    %v470 = vsel %vm454, %v237, -1e+30
    %v471 = vsel %vm455, %v240, -1e+30
    %v472 = vsel %vm456, %v245, -1e+30
    %v473 = vsel %vm457, %v248, -1e+30
    %v474 = vsel %vm458, %v253, -1e+30
    %v475 = vsel %vm459, %v256, -1e+30
    %v476 = vsel %vm460, %v261, -1e+30
    %v477 = vsel %vm461, %v264, -1e+30
    %v478 = vsel %vm462, %v269, -1e+30
    %v479 = vsel %vm463, %v272, -1e+30
    %v480 = vsel %vm464, %v277, -1e+30
    %v481 = vsel %vm465, %v280, -1e+30
    %v482 = vsel %vm466, %v285, -1e+30
    %v483 = vsel %vm467, %v288, -1e+30
    %v484 = vsel %vm468, %v293, -1e+30
    %v485 = vsel %vm469, %v296, -1e+30
    %vm486 = vmand %vm368, %vm454
    %vm487 = vmand %vm369, %vm455
    %vm488 = vmand %vm370, %vm456
    %vm489 = vmand %vm371, %vm457
    %vm490 = vmand %vm372, %vm458
    %vm491 = vmand %vm373, %vm459
    %vm492 = vmand %vm374, %vm460
    %vm493 = vmand %vm375, %vm461
    %vm494 = vmand %vm376, %vm462
    %vm495 = vmand %vm377, %vm463
    %vm496 = vmand %vm378, %vm464
    %vm497 = vmand %vm379, %vm465
    %vm498 = vmand %vm380, %vm466
    %vm499 = vmand %vm381, %vm467
    %vm500 = vmand %vm382, %vm468
    %vm501 = vmand %vm383, %vm469
    %502 = vmax.xlane.f32.xlu0 %v470
    %v503 = vpop.xlane.xlu0 %502
    %504 = vmax.xlane.f32.xlu0 %v471
    %v505 = vpop.xlane.xlu0 %504
    %506 = vmax.xlane.f32.xlu0 %v472
    %v507 = vpop.xlane.xlu0 %506
    %508 = vmax.xlane.f32.xlu0 %v473
    %v509 = vpop.xlane.xlu0 %508
    %510 = vmax.xlane.f32.xlu0 %v474
    %v511 = vpop.xlane.xlu0 %510
    %512 = vmax.xlane.f32.xlu0 %v475
    %v513 = vpop.xlane.xlu0 %512
    %514 = vmax.xlane.f32.xlu0 %v476
    %v515 = vpop.xlane.xlu0 %514
    %516 = vmax.xlane.f32.xlu0 %v477
    %v517 = vpop.xlane.xlu0 %516
    %518 = vmax.xlane.f32.xlu0 %v478
    %v519 = vpop.xlane.xlu0 %518
    %520 = vmax.xlane.f32.xlu0 %v479
    %v521 = vpop.xlane.xlu0 %520
    %522 = vmax.xlane.f32.xlu0 %v480
    %v523 = vpop.xlane.xlu0 %522
    %524 = vmax.xlane.f32.xlu0 %v481
    %v525 = vpop.xlane.xlu0 %524
    %526 = vmax.xlane.f32.xlu0 %v482
    %v527 = vpop.xlane.xlu0 %526
    %528 = vmax.xlane.f32.xlu0 %v483
    %v529 = vpop.xlane.xlu0 %528
    %530 = vmax.xlane.f32.xlu0 %v484
    %v531 = vpop.xlane.xlu0 %530
    %532 = vmax.xlane.f32.xlu0 %v485
    %v533 = vpop.xlane.xlu0 %532
    %v534 = vld [vmem:[#allocation2] sm:$0xff]
    %v535 = vld [vmem:[#allocation2 + $0x8] sm:$0xff]
    %v536 = vld [vmem:[#allocation2 + $0x10] sm:$0xff]
    %v537 = vld [vmem:[#allocation2 + $0x18] sm:$0xff]
    %v538 = vld [vmem:[#allocation2 + $0x20] sm:$0xff]
    %v539 = vld [vmem:[#allocation2 + $0x28] sm:$0xff]
    %v540 = vld [vmem:[#allocation2 + $0x30] sm:$0xff]
    %v541 = vld [vmem:[#allocation2 + $0x38] sm:$0xff]
    %v542 = vld [vmem:[#allocation2 + $0x40] sm:$0xff]
    %v543 = vld [vmem:[#allocation2 + $0x48] sm:$0xff]
    %v544 = vld [vmem:[#allocation2 + $0x50] sm:$0xff]
    %v545 = vld [vmem:[#allocation2 + $0x58] sm:$0xff]
    %v546 = vld [vmem:[#allocation2 + $0x60] sm:$0xff]
    %v547 = vld [vmem:[#allocation2 + $0x68] sm:$0xff]
    %v548 = vld [vmem:[#allocation2 + $0x70] sm:$0xff]
    %v549 = vld [vmem:[#allocation2 + $0x78] sm:$0xff]
    %v550 = vmax.f32 %v534, %v503
    %v551 = vmax.f32 %v535, %v505
    %v552 = vmax.f32 %v536, %v507
    %v553 = vmax.f32 %v537, %v509
    %v554 = vmax.f32 %v538, %v511
    %v555 = vmax.f32 %v539, %v513
    %v556 = vmax.f32 %v540, %v515
    %v557 = vmax.f32 %v541, %v517
    %v558 = vmax.f32 %v542, %v519
    %v559 = vmax.f32 %v543, %v521
    %v560 = vmax.f32 %v544, %v523
    %v561 = vmax.f32 %v545, %v525
    %v562 = vmax.f32 %v546, %v527
    %v563 = vmax.f32 %v547, %v529
    %v564 = vmax.f32 %v548, %v531
    %v565 = vmax.f32 %v549, %v533
    %v566 = vsub.f32 %v534, %v550
    %v567 = vsub.f32 %v535, %v551
    %v568 = vsub.f32 %v536, %v552
    %v569 = vsub.f32 %v537, %v553
    %v570 = vsub.f32 %v538, %v554
    %v571 = vsub.f32 %v539, %v555
    %v572 = vsub.f32 %v540, %v556
    %v573 = vsub.f32 %v541, %v557
    %v574 = vsub.f32 %v542, %v558
    %v575 = vsub.f32 %v543, %v559
    %v576 = vsub.f32 %v544, %v560
    %v577 = vsub.f32 %v545, %v561
    %v578 = vsub.f32 %v546, %v562
    %v579 = vsub.f32 %v547, %v563
    %v580 = vsub.f32 %v548, %v564
    %v581 = vsub.f32 %v549, %v565
    %v582 = vmul.f32 %v566, 1.442695
    %v583 = vpow.pop %v582
    %v584 = vmul.f32 %v567, 1.442695
    %v585 = vpow.pop %v584
    %v586 = vmul.f32 %v568, 1.442695
    %v587 = vpow.pop %v586
    %v588 = vmul.f32 %v569, 1.442695
    %v589 = vpow.pop %v588
    %v590 = vmul.f32 %v570, 1.442695
    %v591 = vpow.pop %v590
    %v592 = vmul.f32 %v571, 1.442695
    %v593 = vpow.pop %v592
    %v594 = vmul.f32 %v572, 1.442695
    %v595 = vpow.pop %v594
    %v596 = vmul.f32 %v573, 1.442695
    %v597 = vpow.pop %v596
    %v598 = vmul.f32 %v574, 1.442695
    %v599 = vpow.pop %v598
    %v600 = vmul.f32 %v575, 1.442695
    %v601 = vpow.pop %v600
    %v602 = vmul.f32 %v576, 1.442695
    %v603 = vpow.pop %v602
    %v604 = vmul.f32 %v577, 1.442695
    %v605 = vpow.pop %v604
    %v606 = vmul.f32 %v578, 1.442695
    %v607 = vpow.pop %v606
    %v608 = vmul.f32 %v579, 1.442695
    %v609 = vpow.pop %v608
    %v610 = vmul.f32 %v580, 1.442695
    %v611 = vpow.pop %v610
    %v612 = vmul.f32 %v581, 1.442695
    %v613 = vpow.pop %v612
    %v614 = vld [vmem:[#allocation3] sm:$0xff]
    %v615 = vld [vmem:[#allocation3 + $0x8] sm:$0xff]
    %v616 = vld [vmem:[#allocation3 + $0x10] sm:$0xff]
    %v617 = vld [vmem:[#allocation3 + $0x18] sm:$0xff]
    %v618 = vld [vmem:[#allocation3 + $0x20] sm:$0xff]
    %v619 = vld [vmem:[#allocation3 + $0x28] sm:$0xff]
    %v620 = vld [vmem:[#allocation3 + $0x30] sm:$0xff]
    %v621 = vld [vmem:[#allocation3 + $0x38] sm:$0xff]
    %v622 = vld [vmem:[#allocation3 + $0x40] sm:$0xff]
    %v623 = vld [vmem:[#allocation3 + $0x48] sm:$0xff]
    %v624 = vld [vmem:[#allocation3 + $0x50] sm:$0xff]
    %v625 = vld [vmem:[#allocation3 + $0x58] sm:$0xff]
    %v626 = vld [vmem:[#allocation3 + $0x60] sm:$0xff]
    %v627 = vld [vmem:[#allocation3 + $0x68] sm:$0xff]
    %v628 = vld [vmem:[#allocation3 + $0x70] sm:$0xff]
    %v629 = vld [vmem:[#allocation3 + $0x78] sm:$0xff]
    %v630 = vmul.f32 %v583, %v614
    %v631 = vmul.f32 %v585, %v615
    %v632 = vmul.f32 %v587, %v616
    %v633 = vmul.f32 %v589, %v617
    %v634 = vmul.f32 %v591, %v618
    %v635 = vmul.f32 %v593, %v619
    %v636 = vmul.f32 %v595, %v620
    %v637 = vmul.f32 %v597, %v621
    %v638 = vmul.f32 %v599, %v622
    %v639 = vmul.f32 %v601, %v623
    %v640 = vmul.f32 %v603, %v624
    %v641 = vmul.f32 %v605, %v625
    %v642 = vmul.f32 %v607, %v626
    %v643 = vmul.f32 %v609, %v627
    %v644 = vmul.f32 %v611, %v628
    %v645 = vmul.f32 %v613, %v629
    %647 = vset.pattern.permute.xlu0 0
    %648 = vperm.xlu0 %647, %v550
    %v649 = vpop.permute.xlu0 %648
    %652 = vset.pattern.permute.xlu0 0
    %653 = vperm.xlu0 %652, %v551
    %v654 = vpop.permute.xlu0 %653
    %657 = vset.pattern.permute.xlu0 0
    %658 = vperm.xlu0 %657, %v552
    %v659 = vpop.permute.xlu0 %658
    %662 = vset.pattern.permute.xlu0 0
    %663 = vperm.xlu0 %662, %v553
    %v664 = vpop.permute.xlu0 %663
    %667 = vset.pattern.permute.xlu0 0
    %668 = vperm.xlu0 %667, %v554
    %v669 = vpop.permute.xlu0 %668
    %672 = vset.pattern.permute.xlu0 0
    %673 = vperm.xlu0 %672, %v555
    %v674 = vpop.permute.xlu0 %673
    %677 = vset.pattern.permute.xlu0 0
    %678 = vperm.xlu0 %677, %v556
    %v679 = vpop.permute.xlu0 %678
    %682 = vset.pattern.permute.xlu0 0
    %683 = vperm.xlu0 %682, %v557
    %v684 = vpop.permute.xlu0 %683
    %687 = vset.pattern.permute.xlu0 0
    %688 = vperm.xlu0 %687, %v558
    %v689 = vpop.permute.xlu0 %688
    %692 = vset.pattern.permute.xlu0 0
    %693 = vperm.xlu0 %692, %v559
    %v694 = vpop.permute.xlu0 %693
    %697 = vset.pattern.permute.xlu0 0
    %698 = vperm.xlu0 %697, %v560
    %v699 = vpop.permute.xlu0 %698
    %702 = vset.pattern.permute.xlu0 0
    %703 = vperm.xlu0 %702, %v561
    %v704 = vpop.permute.xlu0 %703
    %707 = vset.pattern.permute.xlu0 0
    %708 = vperm.xlu0 %707, %v562
    %v709 = vpop.permute.xlu0 %708
    %712 = vset.pattern.permute.xlu0 0
    %713 = vperm.xlu0 %712, %v563
    %v714 = vpop.permute.xlu0 %713
    %717 = vset.pattern.permute.xlu0 0
    %718 = vperm.xlu0 %717, %v564
    %v719 = vpop.permute.xlu0 %718
    %722 = vset.pattern.permute.xlu0 0
    %723 = vperm.xlu0 %722, %v565
    %v724 = vpop.permute.xlu0 %723
    %v726 = vsub.f32 %v470, %v649
    %v727 = vsub.f32 %v471, %v654
    %v728 = vsub.f32 %v472, %v659
    %v729 = vsub.f32 %v473, %v664
    %v730 = vsub.f32 %v474, %v669
    %v731 = vsub.f32 %v475, %v674
    %v732 = vsub.f32 %v476, %v679
    %v733 = vsub.f32 %v477, %v684
    %v734 = vsub.f32 %v478, %v689
    %v735 = vsub.f32 %v479, %v694
    %v736 = vsub.f32 %v480, %v699
    %v737 = vsub.f32 %v481, %v704
    %v738 = vsub.f32 %v482, %v709
    %v739 = vsub.f32 %v483, %v714
    %v740 = vsub.f32 %v484, %v719
    %v741 = vsub.f32 %v485, %v724
    %v742 = vmul.f32 %v726, 1.442695
    %v743 = vpow.pop %v742
    %v744 = vmul.f32 %v727, 1.442695
    %v745 = vpow.pop %v744
    %v746 = vmul.f32 %v728, 1.442695
    %v747 = vpow.pop %v746
    %v748 = vmul.f32 %v729, 1.442695
    %v749 = vpow.pop %v748
    %v750 = vmul.f32 %v730, 1.442695
    %v751 = vpow.pop %v750
    %v752 = vmul.f32 %v731, 1.442695
    %v753 = vpow.pop %v752
    %v754 = vmul.f32 %v732, 1.442695
    %v755 = vpow.pop %v754
    %v756 = vmul.f32 %v733, 1.442695
    %v757 = vpow.pop %v756
    %v758 = vmul.f32 %v734, 1.442695
    %v759 = vpow.pop %v758
    %v760 = vmul.f32 %v735, 1.442695
    %v761 = vpow.pop %v760
    %v762 = vmul.f32 %v736, 1.442695
    %v763 = vpow.pop %v762
    %v764 = vmul.f32 %v737, 1.442695
    %v765 = vpow.pop %v764
    %v766 = vmul.f32 %v738, 1.442695
    %v767 = vpow.pop %v766
    %v768 = vmul.f32 %v739, 1.442695
    %v769 = vpow.pop %v768
    %v770 = vmul.f32 %v740, 1.442695
    %v771 = vpow.pop %v770
    %v772 = vmul.f32 %v741, 1.442695
    %v773 = vpow.pop %v772
    %774 = vadd.xlane.f32.xlu0 %v743
    %v775 = vpop.xlane.xlu0 %774
    %776 = vadd.xlane.f32.xlu0 %v745
    %v777 = vpop.xlane.xlu0 %776
    %778 = vadd.xlane.f32.xlu0 %v747
    %v779 = vpop.xlane.xlu0 %778
    %780 = vadd.xlane.f32.xlu0 %v749
    %v781 = vpop.xlane.xlu0 %780
    %782 = vadd.xlane.f32.xlu0 %v751
    %v783 = vpop.xlane.xlu0 %782
    %784 = vadd.xlane.f32.xlu0 %v753
    %v785 = vpop.xlane.xlu0 %784
    %786 = vadd.xlane.f32.xlu0 %v755
    %v787 = vpop.xlane.xlu0 %786
    %788 = vadd.xlane.f32.xlu0 %v757
    %v789 = vpop.xlane.xlu0 %788
    %790 = vadd.xlane.f32.xlu0 %v759
    %v791 = vpop.xlane.xlu0 %790
    %792 = vadd.xlane.f32.xlu0 %v761
    %v793 = vpop.xlane.xlu0 %792
    %794 = vadd.xlane.f32.xlu0 %v763
    %v795 = vpop.xlane.xlu0 %794
    %796 = vadd.xlane.f32.xlu0 %v765
    %v797 = vpop.xlane.xlu0 %796
    %798 = vadd.xlane.f32.xlu0 %v767
    %v799 = vpop.xlane.xlu0 %798
    %800 = vadd.xlane.f32.xlu0 %v769
    %v801 = vpop.xlane.xlu0 %800
    %802 = vadd.xlane.f32.xlu0 %v771
    %v803 = vpop.xlane.xlu0 %802
    %804 = vadd.xlane.f32.xlu0 %v773
    %v805 = vpop.xlane.xlu0 %804
    %v806 = vadd.f32 %v630, %v775
    %v807 = vadd.f32 %v631, %v777
    %v808 = vadd.f32 %v632, %v779
    %v809 = vadd.f32 %v633, %v781
    %v810 = vadd.f32 %v634, %v783
    %v811 = vadd.f32 %v635, %v785
    %v812 = vadd.f32 %v636, %v787
    %v813 = vadd.f32 %v637, %v789
    %v814 = vadd.f32 %v638, %v791
    %v815 = vadd.f32 %v639, %v793
    %v816 = vadd.f32 %v640, %v795
    %v817 = vadd.f32 %v641, %v797
    %v818 = vadd.f32 %v642, %v799
    %v819 = vadd.f32 %v643, %v801
    %v820 = vadd.f32 %v644, %v803
    %v821 = vadd.f32 %v645, %v805
    %vm822 = vcmask 7168
    %823 = vst.msk [vmem:[#allocation3] sm:$0xff] %vm822, %v806
    %824 = vst.msk [vmem:[#allocation3 + $0x8] sm:$0xff] %vm822, %v807
    %825 = vst.msk [vmem:[#allocation3 + $0x10] sm:$0xff] %vm822, %v808
    %826 = vst.msk [vmem:[#allocation3 + $0x18] sm:$0xff] %vm822, %v809
    %827 = vst.msk [vmem:[#allocation3 + $0x20] sm:$0xff] %vm822, %v810
    %828 = vst.msk [vmem:[#allocation3 + $0x28] sm:$0xff] %vm822, %v811
    %829 = vst.msk [vmem:[#allocation3 + $0x30] sm:$0xff] %vm822, %v812
    %830 = vst.msk [vmem:[#allocation3 + $0x38] sm:$0xff] %vm822, %v813
    %831 = vst.msk [vmem:[#allocation3 + $0x40] sm:$0xff] %vm822, %v814
    %832 = vst.msk [vmem:[#allocation3 + $0x48] sm:$0xff] %vm822, %v815
    %833 = vst.msk [vmem:[#allocation3 + $0x50] sm:$0xff] %vm822, %v816
    %834 = vst.msk [vmem:[#allocation3 + $0x58] sm:$0xff] %vm822, %v817
    %835 = vst.msk [vmem:[#allocation3 + $0x60] sm:$0xff] %vm822, %v818
    %836 = vst.msk [vmem:[#allocation3 + $0x68] sm:$0xff] %vm822, %v819
    %837 = vst.msk [vmem:[#allocation3 + $0x70] sm:$0xff] %vm822, %v820
    %838 = vst.msk [vmem:[#allocation3 + $0x78] sm:$0xff] %vm822, %v821
    %839 = vst.msk [vmem:[#allocation2] sm:$0xff] %vm822, %v550
    %840 = vst.msk [vmem:[#allocation2 + $0x8] sm:$0xff] %vm822, %v551
    %841 = vst.msk [vmem:[#allocation2 + $0x10] sm:$0xff] %vm822, %v552
    %842 = vst.msk [vmem:[#allocation2 + $0x18] sm:$0xff] %vm822, %v553
    %843 = vst.msk [vmem:[#allocation2 + $0x20] sm:$0xff] %vm822, %v554
    %844 = vst.msk [vmem:[#allocation2 + $0x28] sm:$0xff] %vm822, %v555
    %845 = vst.msk [vmem:[#allocation2 + $0x30] sm:$0xff] %vm822, %v556
    %846 = vst.msk [vmem:[#allocation2 + $0x38] sm:$0xff] %vm822, %v557
    %847 = vst.msk [vmem:[#allocation2 + $0x40] sm:$0xff] %vm822, %v558
    %848 = vst.msk [vmem:[#allocation2 + $0x48] sm:$0xff] %vm822, %v559
    %849 = vst.msk [vmem:[#allocation2 + $0x50] sm:$0xff] %vm822, %v560
    %850 = vst.msk [vmem:[#allocation2 + $0x58] sm:$0xff] %vm822, %v561
    %851 = vst.msk [vmem:[#allocation2 + $0x60] sm:$0xff] %vm822, %v562
    %852 = vst.msk [vmem:[#allocation2 + $0x68] sm:$0xff] %vm822, %v563
    %853 = vst.msk [vmem:[#allocation2 + $0x70] sm:$0xff] %vm822, %v564
    %854 = vst.msk [vmem:[#allocation2 + $0x78] sm:$0xff] %vm822, %v565
    %v855 = vld [vmem:[#allocation4] sm:$0xff]
    %v856 = vld [vmem:[#allocation4 + $0x8] sm:$0xff]
    %v857 = vld [vmem:[#allocation4 + $0x10] sm:$0xff]
    %v858 = vld [vmem:[#allocation4 + $0x18] sm:$0xff]
    %v859 = vld [vmem:[#allocation4 + $0x20] sm:$0xff]
    %v860 = vld [vmem:[#allocation4 + $0x28] sm:$0xff]
    %v861 = vld [vmem:[#allocation4 + $0x30] sm:$0xff]
    %v862 = vld [vmem:[#allocation4 + $0x38] sm:$0xff]
    %v863 = vld [vmem:[#allocation4 + $0x40] sm:$0xff]
    %v864 = vld [vmem:[#allocation4 + $0x48] sm:$0xff]
    %v865 = vld [vmem:[#allocation4 + $0x50] sm:$0xff]
    %v866 = vld [vmem:[#allocation4 + $0x58] sm:$0xff]
    %v867 = vld [vmem:[#allocation4 + $0x60] sm:$0xff]
    %v868 = vld [vmem:[#allocation4 + $0x68] sm:$0xff]
    %v869 = vld [vmem:[#allocation4 + $0x70] sm:$0xff]
    %v870 = vld [vmem:[#allocation4 + $0x78] sm:$0xff]
    %v871 = vsel %vm486, %v237, 0.0
    %v872 = vsel %vm487, %v240, 0.0
    %v873 = vsel %vm488, %v245, 0.0
    %v874 = vsel %vm489, %v248, 0.0
    %v875 = vsel %vm490, %v253, 0.0
    %v876 = vsel %vm491, %v256, 0.0
    %v877 = vsel %vm492, %v261, 0.0
    %v878 = vsel %vm493, %v264, 0.0
    %v879 = vsel %vm494, %v269, 0.0
    %v880 = vsel %vm495, %v272, 0.0
    %v881 = vsel %vm496, %v277, 0.0
    %v882 = vsel %vm497, %v280, 0.0
    %v883 = vsel %vm498, %v285, 0.0
    %v884 = vsel %vm499, %v288, 0.0
    %v885 = vsel %vm500, %v293, 0.0
    %v886 = vsel %vm501, %v296, 0.0
    %887 = vadd.xlane.f32.xlu0 %v871
    %v888 = vpop.xlane.xlu0 %887
    %889 = vadd.xlane.f32.xlu0 %v872
    %v890 = vpop.xlane.xlu0 %889
    %891 = vadd.xlane.f32.xlu0 %v873
    %v892 = vpop.xlane.xlu0 %891
    %893 = vadd.xlane.f32.xlu0 %v874
    %v894 = vpop.xlane.xlu0 %893
    %895 = vadd.xlane.f32.xlu0 %v875
    %v896 = vpop.xlane.xlu0 %895
    %897 = vadd.xlane.f32.xlu0 %v876
    %v898 = vpop.xlane.xlu0 %897
    %899 = vadd.xlane.f32.xlu0 %v877
    %v900 = vpop.xlane.xlu0 %899
    %901 = vadd.xlane.f32.xlu0 %v878
    %v902 = vpop.xlane.xlu0 %901
    %903 = vadd.xlane.f32.xlu0 %v879
    %v904 = vpop.xlane.xlu0 %903
    %905 = vadd.xlane.f32.xlu0 %v880
    %v906 = vpop.xlane.xlu0 %905
    %907 = vadd.xlane.f32.xlu0 %v881
    %v908 = vpop.xlane.xlu0 %907
    %909 = vadd.xlane.f32.xlu0 %v882
    %v910 = vpop.xlane.xlu0 %909
    %911 = vadd.xlane.f32.xlu0 %v883
    %v912 = vpop.xlane.xlu0 %911
    %913 = vadd.xlane.f32.xlu0 %v884
    %v914 = vpop.xlane.xlu0 %913
    %915 = vadd.xlane.f32.xlu0 %v885
    %v916 = vpop.xlane.xlu0 %915
    %917 = vadd.xlane.f32.xlu0 %v886
    %v918 = vpop.xlane.xlu0 %917
    %v919 = vadd.f32 %v855, %v888
    %v920 = vadd.f32 %v856, %v890
    %v921 = vadd.f32 %v857, %v892
    %v922 = vadd.f32 %v858, %v894
    %v923 = vadd.f32 %v859, %v896
    %v924 = vadd.f32 %v860, %v898
    %v925 = vadd.f32 %v861, %v900
    %v926 = vadd.f32 %v862, %v902
    %v927 = vadd.f32 %v863, %v904
    %v928 = vadd.f32 %v864, %v906
    %v929 = vadd.f32 %v865, %v908
    %v930 = vadd.f32 %v866, %v910
    %v931 = vadd.f32 %v867, %v912
    %v932 = vadd.f32 %v868, %v914
    %v933 = vadd.f32 %v869, %v916
    %v934 = vadd.f32 %v870, %v918
    %935 = vst.msk [vmem:[#allocation4] sm:$0xff] %vm822, %v919
    %936 = vst.msk [vmem:[#allocation4 + $0x8] sm:$0xff] %vm822, %v920
    %937 = vst.msk [vmem:[#allocation4 + $0x10] sm:$0xff] %vm822, %v921
    %938 = vst.msk [vmem:[#allocation4 + $0x18] sm:$0xff] %vm822, %v922
    %939 = vst.msk [vmem:[#allocation4 + $0x20] sm:$0xff] %vm822, %v923
    %940 = vst.msk [vmem:[#allocation4 + $0x28] sm:$0xff] %vm822, %v924
    %941 = vst.msk [vmem:[#allocation4 + $0x30] sm:$0xff] %vm822, %v925
    %942 = vst.msk [vmem:[#allocation4 + $0x38] sm:$0xff] %vm822, %v926
    %943 = vst.msk [vmem:[#allocation4 + $0x40] sm:$0xff] %vm822, %v927
    %944 = vst.msk [vmem:[#allocation4 + $0x48] sm:$0xff] %vm822, %v928
    %945 = vst.msk [vmem:[#allocation4 + $0x50] sm:$0xff] %vm822, %v929
    %946 = vst.msk [vmem:[#allocation4 + $0x58] sm:$0xff] %vm822, %v930
    %947 = vst.msk [vmem:[#allocation4 + $0x60] sm:$0xff] %vm822, %v931
    %948 = vst.msk [vmem:[#allocation4 + $0x68] sm:$0xff] %vm822, %v932
    %949 = vst.msk [vmem:[#allocation4 + $0x70] sm:$0xff] %vm822, %v933
    %950 = vst.msk [vmem:[#allocation4 + $0x78] sm:$0xff] %vm822, %v934
  $region29: #{tpu_custom_call.1} parent=0 // pred_fallthru
    _
  %p951 = pneg %p393
  // Predicated region
  $region30: #{tpu_custom_call.1} parent=0 // pred_check
    _
  $region31: #{tpu_custom_call.1} parent=0 // pred_check_branch
    %953 = sbr.rel (%p393) target = $region33
  $region32: #{tpu_custom_call.1} parent=0 // pred_region
    %954 = vmax.xlane.f32.xlu0 %v237
    %v955 = vpop.xlane.xlu0 %954
    %956 = vmax.xlane.f32.xlu0 %v240
    %v957 = vpop.xlane.xlu0 %956
    %958 = vmax.xlane.f32.xlu0 %v245
    %v959 = vpop.xlane.xlu0 %958
    %960 = vmax.xlane.f32.xlu0 %v248
    %v961 = vpop.xlane.xlu0 %960
    %962 = vmax.xlane.f32.xlu0 %v253
    %v963 = vpop.xlane.xlu0 %962
    %964 = vmax.xlane.f32.xlu0 %v256
    %v965 = vpop.xlane.xlu0 %964
    %966 = vmax.xlane.f32.xlu0 %v261
    %v967 = vpop.xlane.xlu0 %966
    %968 = vmax.xlane.f32.xlu0 %v264
    %v969 = vpop.xlane.xlu0 %968
    %970 = vmax.xlane.f32.xlu0 %v269
    %v971 = vpop.xlane.xlu0 %970
    %972 = vmax.xlane.f32.xlu0 %v272
    %v973 = vpop.xlane.xlu0 %972
    %974 = vmax.xlane.f32.xlu0 %v277
    %v975 = vpop.xlane.xlu0 %974
    %976 = vmax.xlane.f32.xlu0 %v280
    %v977 = vpop.xlane.xlu0 %976
    %978 = vmax.xlane.f32.xlu0 %v285
    %v979 = vpop.xlane.xlu0 %978
    %980 = vmax.xlane.f32.xlu0 %v288
    %v981 = vpop.xlane.xlu0 %980
    %982 = vmax.xlane.f32.xlu0 %v293
    %v983 = vpop.xlane.xlu0 %982
    %984 = vmax.xlane.f32.xlu0 %v296
    %v985 = vpop.xlane.xlu0 %984
    %v986 = vld [vmem:[#allocation2] sm:$0xff]
    %v987 = vld [vmem:[#allocation2 + $0x8] sm:$0xff]
    %v988 = vld [vmem:[#allocation2 + $0x10] sm:$0xff]
    %v989 = vld [vmem:[#allocation2 + $0x18] sm:$0xff]
    %v990 = vld [vmem:[#allocation2 + $0x20] sm:$0xff]
    %v991 = vld [vmem:[#allocation2 + $0x28] sm:$0xff]
    %v992 = vld [vmem:[#allocation2 + $0x30] sm:$0xff]
    %v993 = vld [vmem:[#allocation2 + $0x38] sm:$0xff]
    %v994 = vld [vmem:[#allocation2 + $0x40] sm:$0xff]
    %v995 = vld [vmem:[#allocation2 + $0x48] sm:$0xff]
    %v996 = vld [vmem:[#allocation2 + $0x50] sm:$0xff]
    %v997 = vld [vmem:[#allocation2 + $0x58] sm:$0xff]
    %v998 = vld [vmem:[#allocation2 + $0x60] sm:$0xff]
    %v999 = vld [vmem:[#allocation2 + $0x68] sm:$0xff]
    %v1000 = vld [vmem:[#allocation2 + $0x70] sm:$0xff]
    %v1001 = vld [vmem:[#allocation2 + $0x78] sm:$0xff]
    %v1002 = vmax.f32 %v986, %v955
    %v1003 = vmax.f32 %v987, %v957
    %v1004 = vmax.f32 %v988, %v959
    %v1005 = vmax.f32 %v989, %v961
    %v1006 = vmax.f32 %v990, %v963
    %v1007 = vmax.f32 %v991, %v965
    %v1008 = vmax.f32 %v992, %v967
    %v1009 = vmax.f32 %v993, %v969
    %v1010 = vmax.f32 %v994, %v971
    %v1011 = vmax.f32 %v995, %v973
    %v1012 = vmax.f32 %v996, %v975
    %v1013 = vmax.f32 %v997, %v977
    %v1014 = vmax.f32 %v998, %v979
    %v1015 = vmax.f32 %v999, %v981
    %v1016 = vmax.f32 %v1000, %v983
    %v1017 = vmax.f32 %v1001, %v985
    %v1018 = vsub.f32 %v986, %v1002
    %v1019 = vsub.f32 %v987, %v1003
    %v1020 = vsub.f32 %v988, %v1004
    %v1021 = vsub.f32 %v989, %v1005
    %v1022 = vsub.f32 %v990, %v1006
    %v1023 = vsub.f32 %v991, %v1007
    %v1024 = vsub.f32 %v992, %v1008
    %v1025 = vsub.f32 %v993, %v1009
    %v1026 = vsub.f32 %v994, %v1010
    %v1027 = vsub.f32 %v995, %v1011
    %v1028 = vsub.f32 %v996, %v1012
    %v1029 = vsub.f32 %v997, %v1013
    %v1030 = vsub.f32 %v998, %v1014
    %v1031 = vsub.f32 %v999, %v1015
    %v1032 = vsub.f32 %v1000, %v1016
    %v1033 = vsub.f32 %v1001, %v1017
    %v1034 = vmul.f32 %v1018, 1.442695
    %v1035 = vpow.pop %v1034
    %v1036 = vmul.f32 %v1019, 1.442695
    %v1037 = vpow.pop %v1036
    %v1038 = vmul.f32 %v1020, 1.442695
    %v1039 = vpow.pop %v1038
    %v1040 = vmul.f32 %v1021, 1.442695
    %v1041 = vpow.pop %v1040
    %v1042 = vmul.f32 %v1022, 1.442695
    %v1043 = vpow.pop %v1042
    %v1044 = vmul.f32 %v1023, 1.442695
    %v1045 = vpow.pop %v1044
    %v1046 = vmul.f32 %v1024, 1.442695
    %v1047 = vpow.pop %v1046
    %v1048 = vmul.f32 %v1025, 1.442695
    %v1049 = vpow.pop %v1048
    %v1050 = vmul.f32 %v1026, 1.442695
    %v1051 = vpow.pop %v1050
    %v1052 = vmul.f32 %v1027, 1.442695
    %v1053 = vpow.pop %v1052
    %v1054 = vmul.f32 %v1028, 1.442695
    %v1055 = vpow.pop %v1054
    %v1056 = vmul.f32 %v1029, 1.442695
    %v1057 = vpow.pop %v1056
    %v1058 = vmul.f32 %v1030, 1.442695
    %v1059 = vpow.pop %v1058
    %v1060 = vmul.f32 %v1031, 1.442695
    %v1061 = vpow.pop %v1060
    %v1062 = vmul.f32 %v1032, 1.442695
    %v1063 = vpow.pop %v1062
    %v1064 = vmul.f32 %v1033, 1.442695
    %v1065 = vpow.pop %v1064
    %v1066 = vld [vmem:[#allocation3] sm:$0xff]
    %v1067 = vld [vmem:[#allocation3 + $0x8] sm:$0xff]
    %v1068 = vld [vmem:[#allocation3 + $0x10] sm:$0xff]
    %v1069 = vld [vmem:[#allocation3 + $0x18] sm:$0xff]
    %v1070 = vld [vmem:[#allocation3 + $0x20] sm:$0xff]
    %v1071 = vld [vmem:[#allocation3 + $0x28] sm:$0xff]
    %v1072 = vld [vmem:[#allocation3 + $0x30] sm:$0xff]
    %v1073 = vld [vmem:[#allocation3 + $0x38] sm:$0xff]
    %v1074 = vld [vmem:[#allocation3 + $0x40] sm:$0xff]
    %v1075 = vld [vmem:[#allocation3 + $0x48] sm:$0xff]
    %v1076 = vld [vmem:[#allocation3 + $0x50] sm:$0xff]
    %v1077 = vld [vmem:[#allocation3 + $0x58] sm:$0xff]
    %v1078 = vld [vmem:[#allocation3 + $0x60] sm:$0xff]
    %v1079 = vld [vmem:[#allocation3 + $0x68] sm:$0xff]
    %v1080 = vld [vmem:[#allocation3 + $0x70] sm:$0xff]
    %v1081 = vld [vmem:[#allocation3 + $0x78] sm:$0xff]
    %v1082 = vmul.f32 %v1035, %v1066
    %v1083 = vmul.f32 %v1037, %v1067
    %v1084 = vmul.f32 %v1039, %v1068
    %v1085 = vmul.f32 %v1041, %v1069
    %v1086 = vmul.f32 %v1043, %v1070
    %v1087 = vmul.f32 %v1045, %v1071
    %v1088 = vmul.f32 %v1047, %v1072
    %v1089 = vmul.f32 %v1049, %v1073
    %v1090 = vmul.f32 %v1051, %v1074
    %v1091 = vmul.f32 %v1053, %v1075
    %v1092 = vmul.f32 %v1055, %v1076
    %v1093 = vmul.f32 %v1057, %v1077
    %v1094 = vmul.f32 %v1059, %v1078
    %v1095 = vmul.f32 %v1061, %v1079
    %v1096 = vmul.f32 %v1063, %v1080
    %v1097 = vmul.f32 %v1065, %v1081
    %1099 = vset.pattern.permute.xlu0 0
    %1100 = vperm.xlu0 %1099, %v1002
    %v1101 = vpop.permute.xlu0 %1100
    %1104 = vset.pattern.permute.xlu0 0
    %1105 = vperm.xlu0 %1104, %v1003
    %v1106 = vpop.permute.xlu0 %1105
    %1109 = vset.pattern.permute.xlu0 0
    %1110 = vperm.xlu0 %1109, %v1004
    %v1111 = vpop.permute.xlu0 %1110
    %1114 = vset.pattern.permute.xlu0 0
    %1115 = vperm.xlu0 %1114, %v1005
    %v1116 = vpop.permute.xlu0 %1115
    %1119 = vset.pattern.permute.xlu0 0
    %1120 = vperm.xlu0 %1119, %v1006
    %v1121 = vpop.permute.xlu0 %1120
    %1124 = vset.pattern.permute.xlu0 0
    %1125 = vperm.xlu0 %1124, %v1007
    %v1126 = vpop.permute.xlu0 %1125
    %1129 = vset.pattern.permute.xlu0 0
    %1130 = vperm.xlu0 %1129, %v1008
    %v1131 = vpop.permute.xlu0 %1130
    %1134 = vset.pattern.permute.xlu0 0
    %1135 = vperm.xlu0 %1134, %v1009
    %v1136 = vpop.permute.xlu0 %1135
    %1139 = vset.pattern.permute.xlu0 0
    %1140 = vperm.xlu0 %1139, %v1010
    %v1141 = vpop.permute.xlu0 %1140
    %1144 = vset.pattern.permute.xlu0 0
    %1145 = vperm.xlu0 %1144, %v1011
    %v1146 = vpop.permute.xlu0 %1145
    %1149 = vset.pattern.permute.xlu0 0
    %1150 = vperm.xlu0 %1149, %v1012
    %v1151 = vpop.permute.xlu0 %1150
    %1154 = vset.pattern.permute.xlu0 0
    %1155 = vperm.xlu0 %1154, %v1013
    %v1156 = vpop.permute.xlu0 %1155
    %1159 = vset.pattern.permute.xlu0 0
    %1160 = vperm.xlu0 %1159, %v1014
    %v1161 = vpop.permute.xlu0 %1160
    %1164 = vset.pattern.permute.xlu0 0
    %1165 = vperm.xlu0 %1164, %v1015
    %v1166 = vpop.permute.xlu0 %1165
    %1169 = vset.pattern.permute.xlu0 0
    %1170 = vperm.xlu0 %1169, %v1016
    %v1171 = vpop.permute.xlu0 %1170
    %1174 = vset.pattern.permute.xlu0 0
    %1175 = vperm.xlu0 %1174, %v1017
    %v1176 = vpop.permute.xlu0 %1175
    %v1178 = vsub.f32 %v237, %v1101
    %v1179 = vsub.f32 %v240, %v1106
    %v1180 = vsub.f32 %v245, %v1111
    %v1181 = vsub.f32 %v248, %v1116
    %v1182 = vsub.f32 %v253, %v1121
    %v1183 = vsub.f32 %v256, %v1126
    %v1184 = vsub.f32 %v261, %v1131
    %v1185 = vsub.f32 %v264, %v1136
    %v1186 = vsub.f32 %v269, %v1141
    %v1187 = vsub.f32 %v272, %v1146
    %v1188 = vsub.f32 %v277, %v1151
    %v1189 = vsub.f32 %v280, %v1156
    %v1190 = vsub.f32 %v285, %v1161
    %v1191 = vsub.f32 %v288, %v1166
    %v1192 = vsub.f32 %v293, %v1171
    %v1193 = vsub.f32 %v296, %v1176
    %v1194 = vmul.f32 %v1178, 1.442695
    %v1195 = vpow.pop %v1194
    %v1196 = vmul.f32 %v1179, 1.442695
    %v1197 = vpow.pop %v1196
    %v1198 = vmul.f32 %v1180, 1.442695
    %v1199 = vpow.pop %v1198
    %v1200 = vmul.f32 %v1181, 1.442695
    %v1201 = vpow.pop %v1200
    %v1202 = vmul.f32 %v1182, 1.442695
    %v1203 = vpow.pop %v1202
    %v1204 = vmul.f32 %v1183, 1.442695
    %v1205 = vpow.pop %v1204
    %v1206 = vmul.f32 %v1184, 1.442695
    %v1207 = vpow.pop %v1206
    %v1208 = vmul.f32 %v1185, 1.442695
    %v1209 = vpow.pop %v1208
    %v1210 = vmul.f32 %v1186, 1.442695
    %v1211 = vpow.pop %v1210
    %v1212 = vmul.f32 %v1187, 1.442695
    %v1213 = vpow.pop %v1212
    %v1214 = vmul.f32 %v1188, 1.442695
    %v1215 = vpow.pop %v1214
    %v1216 = vmul.f32 %v1189, 1.442695
    %v1217 = vpow.pop %v1216
    %v1218 = vmul.f32 %v1190, 1.442695
    %v1219 = vpow.pop %v1218
    %v1220 = vmul.f32 %v1191, 1.442695
    %v1221 = vpow.pop %v1220
    %v1222 = vmul.f32 %v1192, 1.442695
    %v1223 = vpow.pop %v1222
    %v1224 = vmul.f32 %v1193, 1.442695
    %v1225 = vpow.pop %v1224
    %1226 = vadd.xlane.f32.xlu0 %v1195
    %v1227 = vpop.xlane.xlu0 %1226
    %1228 = vadd.xlane.f32.xlu0 %v1197
    %v1229 = vpop.xlane.xlu0 %1228
    %1230 = vadd.xlane.f32.xlu0 %v1199
    %v1231 = vpop.xlane.xlu0 %1230
    %1232 = vadd.xlane.f32.xlu0 %v1201
    %v1233 = vpop.xlane.xlu0 %1232
    %1234 = vadd.xlane.f32.xlu0 %v1203
    %v1235 = vpop.xlane.xlu0 %1234
    %1236 = vadd.xlane.f32.xlu0 %v1205
    %v1237 = vpop.xlane.xlu0 %1236
    %1238 = vadd.xlane.f32.xlu0 %v1207
    %v1239 = vpop.xlane.xlu0 %1238
    %1240 = vadd.xlane.f32.xlu0 %v1209
    %v1241 = vpop.xlane.xlu0 %1240
    %1242 = vadd.xlane.f32.xlu0 %v1211
    %v1243 = vpop.xlane.xlu0 %1242
    %1244 = vadd.xlane.f32.xlu0 %v1213
    %v1245 = vpop.xlane.xlu0 %1244
    %1246 = vadd.xlane.f32.xlu0 %v1215
    %v1247 = vpop.xlane.xlu0 %1246
    %1248 = vadd.xlane.f32.xlu0 %v1217
    %v1249 = vpop.xlane.xlu0 %1248
    %1250 = vadd.xlane.f32.xlu0 %v1219
    %v1251 = vpop.xlane.xlu0 %1250
    %1252 = vadd.xlane.f32.xlu0 %v1221
    %v1253 = vpop.xlane.xlu0 %1252
    %1254 = vadd.xlane.f32.xlu0 %v1223
    %v1255 = vpop.xlane.xlu0 %1254
    %1256 = vadd.xlane.f32.xlu0 %v1225
    %v1257 = vpop.xlane.xlu0 %1256
    %v1258 = vadd.f32 %v1082, %v1227
    %v1259 = vadd.f32 %v1083, %v1229
    %v1260 = vadd.f32 %v1084, %v1231
    %v1261 = vadd.f32 %v1085, %v1233
    %v1262 = vadd.f32 %v1086, %v1235
    %v1263 = vadd.f32 %v1087, %v1237
    %v1264 = vadd.f32 %v1088, %v1239
    %v1265 = vadd.f32 %v1089, %v1241
    %v1266 = vadd.f32 %v1090, %v1243
    %v1267 = vadd.f32 %v1091, %v1245
    %v1268 = vadd.f32 %v1092, %v1247
    %v1269 = vadd.f32 %v1093, %v1249
    %v1270 = vadd.f32 %v1094, %v1251
    %v1271 = vadd.f32 %v1095, %v1253
    %v1272 = vadd.f32 %v1096, %v1255
    %v1273 = vadd.f32 %v1097, %v1257
    %vm1274 = vcmask 7168
    %1275 = vst.msk [vmem:[#allocation3] sm:$0xff] %vm1274, %v1258
    %1276 = vst.msk [vmem:[#allocation3 + $0x8] sm:$0xff] %vm1274, %v1259
    %1277 = vst.msk [vmem:[#allocation3 + $0x10] sm:$0xff] %vm1274, %v1260
    %1278 = vst.msk [vmem:[#allocation3 + $0x18] sm:$0xff] %vm1274, %v1261
    %1279 = vst.msk [vmem:[#allocation3 + $0x20] sm:$0xff] %vm1274, %v1262
    %1280 = vst.msk [vmem:[#allocation3 + $0x28] sm:$0xff] %vm1274, %v1263
    %1281 = vst.msk [vmem:[#allocation3 + $0x30] sm:$0xff] %vm1274, %v1264
    %1282 = vst.msk [vmem:[#allocation3 + $0x38] sm:$0xff] %vm1274, %v1265
    %1283 = vst.msk [vmem:[#allocation3 + $0x40] sm:$0xff] %vm1274, %v1266
    %1284 = vst.msk [vmem:[#allocation3 + $0x48] sm:$0xff] %vm1274, %v1267
    %1285 = vst.msk [vmem:[#allocation3 + $0x50] sm:$0xff] %vm1274, %v1268
    %1286 = vst.msk [vmem:[#allocation3 + $0x58] sm:$0xff] %vm1274, %v1269
    %1287 = vst.msk [vmem:[#allocation3 + $0x60] sm:$0xff] %vm1274, %v1270
    %1288 = vst.msk [vmem:[#allocation3 + $0x68] sm:$0xff] %vm1274, %v1271
    %1289 = vst.msk [vmem:[#allocation3 + $0x70] sm:$0xff] %vm1274, %v1272
    %1290 = vst.msk [vmem:[#allocation3 + $0x78] sm:$0xff] %vm1274, %v1273
    %1291 = vst.msk [vmem:[#allocation2] sm:$0xff] %vm1274, %v1002
    %1292 = vst.msk [vmem:[#allocation2 + $0x8] sm:$0xff] %vm1274, %v1003
    %1293 = vst.msk [vmem:[#allocation2 + $0x10] sm:$0xff] %vm1274, %v1004
    %1294 = vst.msk [vmem:[#allocation2 + $0x18] sm:$0xff] %vm1274, %v1005
    %1295 = vst.msk [vmem:[#allocation2 + $0x20] sm:$0xff] %vm1274, %v1006
    %1296 = vst.msk [vmem:[#allocation2 + $0x28] sm:$0xff] %vm1274, %v1007
    %1297 = vst.msk [vmem:[#allocation2 + $0x30] sm:$0xff] %vm1274, %v1008
    %1298 = vst.msk [vmem:[#allocation2 + $0x38] sm:$0xff] %vm1274, %v1009
    %1299 = vst.msk [vmem:[#allocation2 + $0x40] sm:$0xff] %vm1274, %v1010
    %1300 = vst.msk [vmem:[#allocation2 + $0x48] sm:$0xff] %vm1274, %v1011
    %1301 = vst.msk [vmem:[#allocation2 + $0x50] sm:$0xff] %vm1274, %v1012
    %1302 = vst.msk [vmem:[#allocation2 + $0x58] sm:$0xff] %vm1274, %v1013
    %1303 = vst.msk [vmem:[#allocation2 + $0x60] sm:$0xff] %vm1274, %v1014
    %1304 = vst.msk [vmem:[#allocation2 + $0x68] sm:$0xff] %vm1274, %v1015
    %1305 = vst.msk [vmem:[#allocation2 + $0x70] sm:$0xff] %vm1274, %v1016
    %1306 = vst.msk [vmem:[#allocation2 + $0x78] sm:$0xff] %vm1274, %v1017
    %v1307 = vld [vmem:[#allocation4] sm:$0xff]
    %v1308 = vld [vmem:[#allocation4 + $0x8] sm:$0xff]
    %v1309 = vld [vmem:[#allocation4 + $0x10] sm:$0xff]
    %v1310 = vld [vmem:[#allocation4 + $0x18] sm:$0xff]
    %v1311 = vld [vmem:[#allocation4 + $0x20] sm:$0xff]
    %v1312 = vld [vmem:[#allocation4 + $0x28] sm:$0xff]
    %v1313 = vld [vmem:[#allocation4 + $0x30] sm:$0xff]
    %v1314 = vld [vmem:[#allocation4 + $0x38] sm:$0xff]
    %v1315 = vld [vmem:[#allocation4 + $0x40] sm:$0xff]
    %v1316 = vld [vmem:[#allocation4 + $0x48] sm:$0xff]
    %v1317 = vld [vmem:[#allocation4 + $0x50] sm:$0xff]
    %v1318 = vld [vmem:[#allocation4 + $0x58] sm:$0xff]
    %v1319 = vld [vmem:[#allocation4 + $0x60] sm:$0xff]
    %v1320 = vld [vmem:[#allocation4 + $0x68] sm:$0xff]
    %v1321 = vld [vmem:[#allocation4 + $0x70] sm:$0xff]
    %v1322 = vld [vmem:[#allocation4 + $0x78] sm:$0xff]
    %v1323 = vsel %vm368, %v237, 0.0
    %v1324 = vsel %vm369, %v240, 0.0
    %v1325 = vsel %vm370, %v245, 0.0
    %v1326 = vsel %vm371, %v248, 0.0
    %v1327 = vsel %vm372, %v253, 0.0
    %v1328 = vsel %vm373, %v256, 0.0
    %v1329 = vsel %vm374, %v261, 0.0
    %v1330 = vsel %vm375, %v264, 0.0
    %v1331 = vsel %vm376, %v269, 0.0
    %v1332 = vsel %vm377, %v272, 0.0
    %v1333 = vsel %vm378, %v277, 0.0
    %v1334 = vsel %vm379, %v280, 0.0
    %v1335 = vsel %vm380, %v285, 0.0
    %v1336 = vsel %vm381, %v288, 0.0
    %v1337 = vsel %vm382, %v293, 0.0
    %v1338 = vsel %vm383, %v296, 0.0
    %1339 = vadd.xlane.f32.xlu0 %v1323
    %v1340 = vpop.xlane.xlu0 %1339
    %1341 = vadd.xlane.f32.xlu0 %v1324
    %v1342 = vpop.xlane.xlu0 %1341
    %1343 = vadd.xlane.f32.xlu0 %v1325
    %v1344 = vpop.xlane.xlu0 %1343
    %1345 = vadd.xlane.f32.xlu0 %v1326
    %v1346 = vpop.xlane.xlu0 %1345
    %1347 = vadd.xlane.f32.xlu0 %v1327
    %v1348 = vpop.xlane.xlu0 %1347
    %1349 = vadd.xlane.f32.xlu0 %v1328
    %v1350 = vpop.xlane.xlu0 %1349
    %1351 = vadd.xlane.f32.xlu0 %v1329
    %v1352 = vpop.xlane.xlu0 %1351
    %1353 = vadd.xlane.f32.xlu0 %v1330
    %v1354 = vpop.xlane.xlu0 %1353
    %1355 = vadd.xlane.f32.xlu0 %v1331
    %v1356 = vpop.xlane.xlu0 %1355
    %1357 = vadd.xlane.f32.xlu0 %v1332
    %v1358 = vpop.xlane.xlu0 %1357
    %1359 = vadd.xlane.f32.xlu0 %v1333
    %v1360 = vpop.xlane.xlu0 %1359
    %1361 = vadd.xlane.f32.xlu0 %v1334
    %v1362 = vpop.xlane.xlu0 %1361
    %1363 = vadd.xlane.f32.xlu0 %v1335
    %v1364 = vpop.xlane.xlu0 %1363
    %1365 = vadd.xlane.f32.xlu0 %v1336
    %v1366 = vpop.xlane.xlu0 %1365
    %1367 = vadd.xlane.f32.xlu0 %v1337
    %v1368 = vpop.xlane.xlu0 %1367
    %1369 = vadd.xlane.f32.xlu0 %v1338
    %v1370 = vpop.xlane.xlu0 %1369
    %v1371 = vadd.f32 %v1307, %v1340
    %v1372 = vadd.f32 %v1308, %v1342
    %v1373 = vadd.f32 %v1309, %v1344
    %v1374 = vadd.f32 %v1310, %v1346
    %v1375 = vadd.f32 %v1311, %v1348
    %v1376 = vadd.f32 %v1312, %v1350
    %v1377 = vadd.f32 %v1313, %v1352
    %v1378 = vadd.f32 %v1314, %v1354
    %v1379 = vadd.f32 %v1315, %v1356
    %v1380 = vadd.f32 %v1316, %v1358
    %v1381 = vadd.f32 %v1317, %v1360
    %v1382 = vadd.f32 %v1318, %v1362
    %v1383 = vadd.f32 %v1319, %v1364
    %v1384 = vadd.f32 %v1320, %v1366
    %v1385 = vadd.f32 %v1321, %v1368
    %v1386 = vadd.f32 %v1322, %v1370
    %1387 = vst.msk [vmem:[#allocation4] sm:$0xff] %vm1274, %v1371
    %1388 = vst.msk [vmem:[#allocation4 + $0x8] sm:$0xff] %vm1274, %v1372
    %1389 = vst.msk [vmem:[#allocation4 + $0x10] sm:$0xff] %vm1274, %v1373
    %1390 = vst.msk [vmem:[#allocation4 + $0x18] sm:$0xff] %vm1274, %v1374
    %1391 = vst.msk [vmem:[#allocation4 + $0x20] sm:$0xff] %vm1274, %v1375
    %1392 = vst.msk [vmem:[#allocation4 + $0x28] sm:$0xff] %vm1274, %v1376
    %1393 = vst.msk [vmem:[#allocation4 + $0x30] sm:$0xff] %vm1274, %v1377
    %1394 = vst.msk [vmem:[#allocation4 + $0x38] sm:$0xff] %vm1274, %v1378
    %1395 = vst.msk [vmem:[#allocation4 + $0x40] sm:$0xff] %vm1274, %v1379
    %1396 = vst.msk [vmem:[#allocation4 + $0x48] sm:$0xff] %vm1274, %v1380
    %1397 = vst.msk [vmem:[#allocation4 + $0x50] sm:$0xff] %vm1274, %v1381
    %1398 = vst.msk [vmem:[#allocation4 + $0x58] sm:$0xff] %vm1274, %v1382
    %1399 = vst.msk [vmem:[#allocation4 + $0x60] sm:$0xff] %vm1274, %v1383
    %1400 = vst.msk [vmem:[#allocation4 + $0x68] sm:$0xff] %vm1274, %v1384
    %1401 = vst.msk [vmem:[#allocation4 + $0x70] sm:$0xff] %vm1274, %v1385
    %1402 = vst.msk [vmem:[#allocation4 + $0x78] sm:$0xff] %vm1274, %v1386
  $region33: #{tpu_custom_call.1} parent=0 // pred_fallthru
    _
  // Predicated region
  $region34: #{tpu_custom_call.1} parent=0 // pred_check
    %p1403 = pneg %p21
  $region35: #{tpu_custom_call.1} parent=0 // pred_check_branch
    %1405 = sbr.rel (%p1403) target = $region37
  $region36: #{tpu_custom_call.1} parent=0 // pred_region
    %v1406 = vld [vmem:[#allocation2] sm:$0xff]
    %v1407 = vld [vmem:[#allocation2 + $0x8] sm:$0xff]
    %v1408 = vld [vmem:[#allocation2 + $0x10] sm:$0xff]
    %v1409 = vld [vmem:[#allocation2 + $0x18] sm:$0xff]
    %v1410 = vld [vmem:[#allocation2 + $0x20] sm:$0xff]
    %v1411 = vld [vmem:[#allocation2 + $0x28] sm:$0xff]
    %v1412 = vld [vmem:[#allocation2 + $0x30] sm:$0xff]
    %v1413 = vld [vmem:[#allocation2 + $0x38] sm:$0xff]
    %v1414 = vld [vmem:[#allocation2 + $0x40] sm:$0xff]
    %v1415 = vld [vmem:[#allocation2 + $0x48] sm:$0xff]
    %v1416 = vld [vmem:[#allocation2 + $0x50] sm:$0xff]
    %v1417 = vld [vmem:[#allocation2 + $0x58] sm:$0xff]
    %v1418 = vld [vmem:[#allocation2 + $0x60] sm:$0xff]
    %v1419 = vld [vmem:[#allocation2 + $0x68] sm:$0xff]
    %v1420 = vld [vmem:[#allocation2 + $0x70] sm:$0xff]
    %v1421 = vld [vmem:[#allocation2 + $0x78] sm:$0xff]
    %v1422 = vld [vmem:[#allocation3] sm:$0xff]
    %v1423 = vld [vmem:[#allocation3 + $0x8] sm:$0xff]
    %v1424 = vld [vmem:[#allocation3 + $0x10] sm:$0xff]
    %v1425 = vld [vmem:[#allocation3 + $0x18] sm:$0xff]
    %v1426 = vld [vmem:[#allocation3 + $0x20] sm:$0xff]
    %v1427 = vld [vmem:[#allocation3 + $0x28] sm:$0xff]
    %v1428 = vld [vmem:[#allocation3 + $0x30] sm:$0xff]
    %v1429 = vld [vmem:[#allocation3 + $0x38] sm:$0xff]
    %v1430 = vld [vmem:[#allocation3 + $0x40] sm:$0xff]
    %v1431 = vld [vmem:[#allocation3 + $0x48] sm:$0xff]
    %v1432 = vld [vmem:[#allocation3 + $0x50] sm:$0xff]
    %v1433 = vld [vmem:[#allocation3 + $0x58] sm:$0xff]
    %v1434 = vld [vmem:[#allocation3 + $0x60] sm:$0xff]
    %v1435 = vld [vmem:[#allocation3 + $0x68] sm:$0xff]
    %v1436 = vld [vmem:[#allocation3 + $0x70] sm:$0xff]
    %v1437 = vld [vmem:[#allocation3 + $0x78] sm:$0xff]
    %v1438 = vlog2.pop %v1422
    %v1439 = vmul.f32 %v1438, 0.6931472
    %v1440 = vlog2.pop %v1423
    %v1441 = vmul.f32 %v1440, 0.6931472
    %v1442 = vlog2.pop %v1424
    %v1443 = vmul.f32 %v1442, 0.6931472
    %v1444 = vlog2.pop %v1425
    %v1445 = vmul.f32 %v1444, 0.6931472
    %v1446 = vlog2.pop %v1426
    %v1447 = vmul.f32 %v1446, 0.6931472
    %v1448 = vlog2.pop %v1427
    %v1449 = vmul.f32 %v1448, 0.6931472
    %v1450 = vlog2.pop %v1428
    %v1451 = vmul.f32 %v1450, 0.6931472
    %v1452 = vlog2.pop %v1429
    %v1453 = vmul.f32 %v1452, 0.6931472
    %v1454 = vlog2.pop %v1430
    %v1455 = vmul.f32 %v1454, 0.6931472
    %v1456 = vlog2.pop %v1431
    %v1457 = vmul.f32 %v1456, 0.6931472
    %v1458 = vlog2.pop %v1432
    %v1459 = vmul.f32 %v1458, 0.6931472
    %v1460 = vlog2.pop %v1433
    %v1461 = vmul.f32 %v1460, 0.6931472
    %v1462 = vlog2.pop %v1434
    %v1463 = vmul.f32 %v1462, 0.6931472
    %v1464 = vlog2.pop %v1435
    %v1465 = vmul.f32 %v1464, 0.6931472
    %v1466 = vlog2.pop %v1436
    %v1467 = vmul.f32 %v1466, 0.6931472
    %v1468 = vlog2.pop %v1437
    %v1469 = vmul.f32 %v1468, 0.6931472
    %v1470 = vadd.f32 %v1406, %v1439
    %v1471 = vadd.f32 %v1407, %v1441
    %v1472 = vadd.f32 %v1408, %v1443
    %v1473 = vadd.f32 %v1409, %v1445
    %v1474 = vadd.f32 %v1410, %v1447
    %v1475 = vadd.f32 %v1411, %v1449
    %v1476 = vadd.f32 %v1412, %v1451
    %v1477 = vadd.f32 %v1413, %v1453
    %v1478 = vadd.f32 %v1414, %v1455
    %v1479 = vadd.f32 %v1415, %v1457
    %v1480 = vadd.f32 %v1416, %v1459
    %v1481 = vadd.f32 %v1417, %v1461
    %v1482 = vadd.f32 %v1418, %v1463
    %v1483 = vadd.f32 %v1419, %v1465
    %v1484 = vadd.f32 %v1420, %v1467
    %v1485 = vadd.f32 %v1421, %v1469
    %v1486 = vld [vmem:[#allocation4] sm:$0xff]
    %v1487 = vld [vmem:[#allocation4 + $0x8] sm:$0xff]
    %v1488 = vld [vmem:[#allocation4 + $0x10] sm:$0xff]
    %v1489 = vld [vmem:[#allocation4 + $0x18] sm:$0xff]
    %v1490 = vld [vmem:[#allocation4 + $0x20] sm:$0xff]
    %v1491 = vld [vmem:[#allocation4 + $0x28] sm:$0xff]
    %v1492 = vld [vmem:[#allocation4 + $0x30] sm:$0xff]
    %v1493 = vld [vmem:[#allocation4 + $0x38] sm:$0xff]
    %v1494 = vld [vmem:[#allocation4 + $0x40] sm:$0xff]
    %v1495 = vld [vmem:[#allocation4 + $0x48] sm:$0xff]
    %v1496 = vld [vmem:[#allocation4 + $0x50] sm:$0xff]
    %v1497 = vld [vmem:[#allocation4 + $0x58] sm:$0xff]
    %v1498 = vld [vmem:[#allocation4 + $0x60] sm:$0xff]
    %v1499 = vld [vmem:[#allocation4 + $0x68] sm:$0xff]
    %v1500 = vld [vmem:[#allocation4 + $0x70] sm:$0xff]
    %v1501 = vld [vmem:[#allocation4 + $0x78] sm:$0xff]
    %v1502 = vld [vmem:[%s4] sm:$0xff]
    %v1503 = vld [vmem:[%s4 + $0x8] sm:$0xff]
    %v1504 = vld [vmem:[%s4 + $0x10] sm:$0xff]
    %v1505 = vld [vmem:[%s4 + $0x18] sm:$0xff]
    %v1506 = vld [vmem:[%s4 + $0x20] sm:$0xff]
    %v1507 = vld [vmem:[%s4 + $0x28] sm:$0xff]
    %v1508 = vld [vmem:[%s4 + $0x30] sm:$0xff]
    %v1509 = vld [vmem:[%s4 + $0x38] sm:$0xff]
    %v1510 = vld [vmem:[%s4 + $0x40] sm:$0xff]
    %v1511 = vld [vmem:[%s4 + $0x48] sm:$0xff]
    %v1512 = vld [vmem:[%s4 + $0x50] sm:$0xff]
    %v1513 = vld [vmem:[%s4 + $0x58] sm:$0xff]
    %v1514 = vld [vmem:[%s4 + $0x60] sm:$0xff]
    %v1515 = vld [vmem:[%s4 + $0x68] sm:$0xff]
    %v1516 = vld [vmem:[%s4 + $0x70] sm:$0xff]
    %v1517 = vld [vmem:[%s4 + $0x78] sm:$0xff]
    %v1518 = vmul.f32 %v1486, %v1502
    %v1519 = vmul.f32 %v1487, %v1503
    %v1520 = vmul.f32 %v1488, %v1504
    %v1521 = vmul.f32 %v1489, %v1505
    %v1522 = vmul.f32 %v1490, %v1506
    %v1523 = vmul.f32 %v1491, %v1507
    %v1524 = vmul.f32 %v1492, %v1508
    %v1525 = vmul.f32 %v1493, %v1509
    %v1526 = vmul.f32 %v1494, %v1510
    %v1527 = vmul.f32 %v1495, %v1511
    %v1528 = vmul.f32 %v1496, %v1512
    %v1529 = vmul.f32 %v1497, %v1513
    %v1530 = vmul.f32 %v1498, %v1514
    %v1531 = vmul.f32 %v1499, %v1515
    %v1532 = vmul.f32 %v1500, %v1516
    %v1533 = vmul.f32 %v1501, %v1517
    %v1534 = vsub.f32 %v1518, %v1470
    %v1535 = vsub.f32 %v1519, %v1471
    %v1536 = vsub.f32 %v1520, %v1472
    %v1537 = vsub.f32 %v1521, %v1473
    %v1538 = vsub.f32 %v1522, %v1474
    %v1539 = vsub.f32 %v1523, %v1475
    %v1540 = vsub.f32 %v1524, %v1476
    %v1541 = vsub.f32 %v1525, %v1477
    %v1542 = vsub.f32 %v1526, %v1478
    %v1543 = vsub.f32 %v1527, %v1479
    %v1544 = vsub.f32 %v1528, %v1480
    %v1545 = vsub.f32 %v1529, %v1481
    %v1546 = vsub.f32 %v1530, %v1482
    %v1547 = vsub.f32 %v1531, %v1483
    %v1548 = vsub.f32 %v1532, %v1484
    %v1549 = vsub.f32 %v1533, %v1485
    %v1550 = vmul.f32 %v1534, -1.0
    %v1551 = vmul.f32 %v1535, -1.0
    %v1552 = vmul.f32 %v1536, -1.0
    %v1553 = vmul.f32 %v1537, -1.0
    %v1554 = vmul.f32 %v1538, -1.0
    %v1555 = vmul.f32 %v1539, -1.0
    %v1556 = vmul.f32 %v1540, -1.0
    %v1557 = vmul.f32 %v1541, -1.0
    %v1558 = vmul.f32 %v1542, -1.0
    %v1559 = vmul.f32 %v1543, -1.0
    %v1560 = vmul.f32 %v1544, -1.0
    %v1561 = vmul.f32 %v1545, -1.0
    %v1562 = vmul.f32 %v1546, -1.0
    %v1563 = vmul.f32 %v1547, -1.0
    %v1564 = vmul.f32 %v1548, -1.0
    %v1565 = vmul.f32 %v1549, -1.0
    %v1566 = vlaneseq
    %v1567 = vshrl.u32 %v1566, 7
    %v1568 = vadd.s32 %v1567, 8
    %v1569 = vadd.s32 %v1567, 16
    %v1570 = vadd.s32 %v1567, 24
    %v1571 = vadd.s32 %v1567, 32
    %v1572 = vadd.s32 %v1567, 40
    %v1573 = vadd.s32 %v1567, 48
    %v1574 = vadd.s32 %v1567, 56
    %v1575 = vadd.s32 %v1567, 64
    %v1576 = vadd.s32 %v1567, 72
    %v1577 = vadd.s32 %v1567, 80
    %v1578 = vadd.s32 %v1567, 88
    %v1579 = vadd.s32 %v1567, 96
    %v1580 = vadd.s32 %v1567, 104
    %v1581 = vadd.s32 %v1567, 112
    %v1582 = vadd.s32 %v1567, 120
    %v1583 = vstv %s384
    %v1584 = vadd.s32 %v1583, %v1567
    %v1585 = vadd.s32 %v1583, %v1568
    %v1586 = vadd.s32 %v1583, %v1569
    %v1587 = vadd.s32 %v1583, %v1570
    %v1588 = vadd.s32 %v1583, %v1571
    %v1589 = vadd.s32 %v1583, %v1572
    %v1590 = vadd.s32 %v1583, %v1573
    %v1591 = vadd.s32 %v1583, %v1574
    %v1592 = vadd.s32 %v1583, %v1575
    %v1593 = vadd.s32 %v1583, %v1576
    %v1594 = vadd.s32 %v1583, %v1577
    %v1595 = vadd.s32 %v1583, %v1578
    %v1596 = vadd.s32 %v1583, %v1579
    %v1597 = vadd.s32 %v1583, %v1580
    %v1598 = vadd.s32 %v1583, %v1581
    %v1599 = vadd.s32 %v1583, %v1582
    %vm1600 = vcmp.lt.s32.totalorder %v1584, 16
    %vm1601 = vcmp.lt.s32.totalorder %v1585, 16
    %vm1602 = vcmp.lt.s32.totalorder %v1586, 16
    %vm1603 = vcmp.lt.s32.totalorder %v1587, 16
    %vm1604 = vcmp.lt.s32.totalorder %v1588, 16
    %vm1605 = vcmp.lt.s32.totalorder %v1589, 16
    %vm1606 = vcmp.lt.s32.totalorder %v1590, 16
    %vm1607 = vcmp.lt.s32.totalorder %v1591, 16
    %vm1608 = vcmp.lt.s32.totalorder %v1592, 16
    %vm1609 = vcmp.lt.s32.totalorder %v1593, 16
    %vm1610 = vcmp.lt.s32.totalorder %v1594, 16
    %vm1611 = vcmp.lt.s32.totalorder %v1595, 16
    %vm1612 = vcmp.lt.s32.totalorder %v1596, 16
    %vm1613 = vcmp.lt.s32.totalorder %v1597, 16
    %vm1614 = vcmp.lt.s32.totalorder %v1598, 16
    %vm1615 = vcmp.lt.s32.totalorder %v1599, 16
    %v1616 = vsel %vm1600, %v1550, 0.0
    %v1617 = vsel %vm1601, %v1551, 0.0
    %v1618 = vsel %vm1602, %v1552, 0.0
    %v1619 = vsel %vm1603, %v1553, 0.0
    %v1620 = vsel %vm1604, %v1554, 0.0
    %v1621 = vsel %vm1605, %v1555, 0.0
    %v1622 = vsel %vm1606, %v1556, 0.0
    %v1623 = vsel %vm1607, %v1557, 0.0
    %v1624 = vsel %vm1608, %v1558, 0.0
    %v1625 = vsel %vm1609, %v1559, 0.0
    %v1626 = vsel %vm1610, %v1560, 0.0
    %v1627 = vsel %vm1611, %v1561, 0.0
    %v1628 = vsel %vm1612, %v1562, 0.0
    %v1629 = vsel %vm1613, %v1563, 0.0
    %v1630 = vsel %vm1614, %v1564, 0.0
    %v1631 = vsel %vm1615, %v1565, 0.0
    %vm1632 = vcmask 7168
    %1633 = vst.msk [vmem:[%s5] sm:$0xff] %vm1632, %v1616
    %1634 = vst.msk [vmem:[%s5 + $0x8] sm:$0xff] %vm1632, %v1617
    %1635 = vst.msk [vmem:[%s5 + $0x10] sm:$0xff] %vm1632, %v1618
    %1636 = vst.msk [vmem:[%s5 + $0x18] sm:$0xff] %vm1632, %v1619
    %1637 = vst.msk [vmem:[%s5 + $0x20] sm:$0xff] %vm1632, %v1620
    %1638 = vst.msk [vmem:[%s5 + $0x28] sm:$0xff] %vm1632, %v1621
    %1639 = vst.msk [vmem:[%s5 + $0x30] sm:$0xff] %vm1632, %v1622
    %1640 = vst.msk [vmem:[%s5 + $0x38] sm:$0xff] %vm1632, %v1623
    %1641 = vst.msk [vmem:[%s5 + $0x40] sm:$0xff] %vm1632, %v1624
    %1642 = vst.msk [vmem:[%s5 + $0x48] sm:$0xff] %vm1632, %v1625
    %1643 = vst.msk [vmem:[%s5 + $0x50] sm:$0xff] %vm1632, %v1626
    %1644 = vst.msk [vmem:[%s5 + $0x58] sm:$0xff] %vm1632, %v1627
    %1645 = vst.msk [vmem:[%s5 + $0x60] sm:$0xff] %vm1632, %v1628
    %1646 = vst.msk [vmem:[%s5 + $0x68] sm:$0xff] %vm1632, %v1629
    %1647 = vst.msk [vmem:[%s5 + $0x70] sm:$0xff] %vm1632, %v1630
    %1648 = vst.msk [vmem:[%s5 + $0x78] sm:$0xff] %vm1632, %v1631
  $region37: #{tpu_custom_call.1} parent=0 // pred_fallthru
    _
  // Predicated region
  $region38: #{tpu_custom_call.1} parent=0 // pred_check
    _
  $region39: #{tpu_custom_call.1} parent=0 // pred_check_branch
    %1650 = sbr.rel (0) target = $region41
  $region40: #{tpu_custom_call.1} parent=0 // pred_region
    _
  $region41: #{tpu_custom_call.1} parent=0 // pred_fallthru
    _
  // Predicated region
  $region42: #{tpu_custom_call.1} parent=0 // pred_check
    _
  $region43: #{tpu_custom_call.1} parent=0 // pred_check_branch
    %1652 = sbr.rel (0) target = $region45
  $region44: #{tpu_custom_call.1} parent=0 // pred_region
    _
  $region45: #{tpu_custom_call.1} parent=0 // pred_fallthru
    _

</llo_original>
